<compile_context>
chip_gen: v7x
topology: tpu7x:2x2x1
jax: 0.10.0
libtpu: 0.0.40
codegen_flags: <defaults>
</compile_context>

<pallas_src>
import functools

import jax
import jax.numpy as jnp
from jax.experimental import pallas as pl
from jax.experimental.pallas import tpu as pltpu


_MAX_TILE_B = 2048      # batch rows per grid step (batch lives on the lane dim)
_LANE = 128             # lane-dim tiling granularity


def _round_up(n, m):
    return ((n + m - 1) // m) * m


# ---------------------------------------------------------------------------
# Kernel: one batch tile of the full MLP, feature-major (features x batch).
# ---------------------------------------------------------------------------
def _critic_kernel(xa_ref, w1_ref, b1_ref, w2_ref, b2_ref, w3_ref, b3_ref,
                   w4_ref, b4_ref, o_ref, *, use_sigmoid):
    # fc1: single bf16 matmul over the pre-concatenated [x, actions] block; the
    # 1/max_action scale is already folded into w1's action columns.
    xa = xa_ref[...].astype(jnp.bfloat16)                       # (K, tile_b)
    h = jnp.dot(w1_ref[...], xa,
                preferred_element_type=jnp.float32) + b1_ref[...]
    h = jnp.maximum(h, 0.0)                                     # (H, tile_b) f32

    # fc2 / fc3: bf16 operands on the MXU, f32 accumulation; bias + ReLU in f32.
    h = jnp.dot(w2_ref[...], h.astype(jnp.bfloat16),
                preferred_element_type=jnp.float32) + b2_ref[...]
    h = jnp.maximum(h, 0.0)

    h = jnp.dot(w3_ref[...], h.astype(jnp.bfloat16),
                preferred_element_type=jnp.float32) + b3_ref[...]
    h = jnp.maximum(h, 0.0)

    # q_out (K=256, N=1): f32 VPU multiply + sublane reduce. Result is already a
    # lane-dense (1, tile_b) row, so the store is wide/unmasked — no relayout.
    q = jnp.sum(h * w4_ref[...], axis=0, keepdims=True) + b4_ref[...]
    if use_sigmoid:
        q = jax.nn.sigmoid(q)

    o_ref[...] = q.astype(o_ref.dtype)


# ---------------------------------------------------------------------------
# Wrapper: batch tiling + single layout op (concat/transpose/pad) + pallas_call.
# ---------------------------------------------------------------------------
@functools.partial(jax.jit, static_argnames=("activation",))
def critic_forward(x, actions, params, *, activation=None):
    w1, b1, w2, b2, w3, b3, w4, b4 = params
    B = x.shape[0]
    K = w1.shape[1]          # obs + goal + action
    H = w1.shape[0]          # hidden (256)

    # Batch sits on the lane dim, so tiles are multiples of 128. Use >= 2 grid
    # steps whenever the padded batch allows it so the "parallel" axis can be
    # sharded across both v7x TensorCores.
    b128 = _round_up(B, _LANE)
    num_tiles = max(1, pl.cdiv(b128, _MAX_TILE_B))
    if num_tiles == 1 and b128 > _LANE:
        num_tiles = 2
    tile_b = _round_up(pl.cdiv(b128, num_tiles), _LANE)
    Bp = tile_b * num_tiles

    # One small wrapper-side layout op (concat + transpose + pad fuse in XLA):
    # presents a lane-dense (K, Bp) input slab. The actions scale lives in w1.
    xa_t = jnp.concatenate(
        [x.astype(jnp.float32), actions.astype(jnp.float32)], axis=1).T   # (K, B)
    if Bp != B:
        xa_t = jnp.pad(xa_t, ((0, 0), (0, Bp - B)))

    const = lambda i: (0, 0)
    resident = dict(pipeline_mode=pl.Buffered(1))   # fetch once, single VMEM buffer

    flops = 2 * Bp * (K * H + 2 * H * H + H)
    transcendentals = Bp if activation == "sigmoid" else 0
    bytes_accessed = int(
        xa_t.size * 4 + Bp * 4
        + sum(int(a.size) * a.dtype.itemsize
              for a in (w1, b1, w2, b2, w3, b3, w4, b4)))

    kernel = functools.partial(_critic_kernel,
                               use_sigmoid=(activation == "sigmoid"))

    out = pl.pallas_call(
        kernel,
        out_shape=jax.ShapeDtypeStruct((1, Bp), jnp.float32),
        grid=(num_tiles,),
        in_specs=[
            pl.BlockSpec((K, tile_b), lambda i: (0, i)),        # [x|a] tile (streamed)
            pl.BlockSpec((H, K), const, **resident),            # w1 (bf16, scale folded)
            pl.BlockSpec((H, 1), const, **resident),            # b1
            pl.BlockSpec((H, H), const, **resident),            # w2 (bf16)
            pl.BlockSpec((H, 1), const, **resident),            # b2
            pl.BlockSpec((H, H), const, **resident),            # w3 (bf16)
            pl.BlockSpec((H, 1), const, **resident),            # b3
            pl.BlockSpec((H, 1), const, **resident),            # w4 column (f32, VPU)
            pl.BlockSpec((1, 1), const, **resident),            # b4
        ],
        out_specs=pl.BlockSpec((1, tile_b), lambda i: (0, i)),  # lane-dense q row
        compiler_params=pltpu.CompilerParams(
            dimension_semantics=("parallel",),                  # megacore-shardable
            vmem_limit_bytes=32 * 1024 * 1024,
        ),
        cost_estimate=pl.CostEstimate(
            flops=flops,
            transcendentals=transcendentals,
            bytes_accessed=bytes_accessed),
    )(xa_t, w1, b1, w2, b2, w3, b3, w4, b4)

    return out[0, :B][:, None]                                  # back to (B, 1)


# ---------------------------------------------------------------------------
# Parameter init matching the PyTorch module: xavier_uniform_(gain=1), zero bias.
# Weights stored (out_features, in_features) like nn.Linear; the action columns of
# fc1 are pre-scaled by 1/max_action; fc1/fc2/fc3 are bf16, q_out stays f32.
# ---------------------------------------------------------------------------
def _xavier_uniform(key, shape, fan_in, fan_out):
    limit = (6.0 / (fan_in + fan_out)) ** 0.5
    return jax.random.uniform(key, shape, jnp.float32, -limit, limit)


def init_critic_params(key, obs_goal_dim, action_dim, max_action, hidden=256):
    k1, k2, k3, k4 = jax.random.split(key, 4)
    in_dim = obs_goal_dim + action_dim

    w1 = _xavier_uniform(k1, (hidden, in_dim), in_dim, hidden)
    w1 = w1.at[:, obs_goal_dim:].multiply(1.0 / max_action)   # fold actions/max_action
    w1 = w1.astype(jnp.bfloat16)
    b1 = jnp.zeros((hidden, 1), jnp.float32)

    w2 = _xavier_uniform(k2, (hidden, hidden), hidden, hidden).astype(jnp.bfloat16)
    b2 = jnp.zeros((hidden, 1), jnp.float32)
    w3 = _xavier_uniform(k3, (hidden, hidden), hidden, hidden).astype(jnp.bfloat16)
    b3 = jnp.zeros((hidden, 1), jnp.float32)

    w4 = _xavier_uniform(k4, (hidden, 1), hidden, 1)          # q_out column, f32
    b4 = jnp.zeros((1, 1), jnp.float32)
    return (w1, b1, w2, b2, w3, b3, w4, b4)


# Pure-JAX reference (same math; bf16 weights upcast to f32) for a sanity check.
def _critic_reference(x, actions, params, activation=None):
    w1, b1, w2, b2, w3, b3, w4, b4 = params
    xa = jnp.concatenate([x, actions], axis=1)     # scale already folded into w1
    h = jnp.maximum(xa @ w1.astype(jnp.float32).T + b1[:, 0], 0.0)
    h = jnp.maximum(h @ w2.astype(jnp.float32).T + b2[:, 0], 0.0)
    h = jnp.maximum(h @ w3.astype(jnp.float32).T + b3[:, 0], 0.0)
    q = h @ w4 + b4[0]
    if activation == "sigmoid":
        q = jax.nn.sigmoid(q)
    return q


if __name__ == "__main__":
    # Small env_params consistent with the module's __init__.
    env_params = {"obs": 10, "goal": 3, "action": 4, "action_max": 1.0}
    batch = 2
    obs_goal_dim = env_params["obs"] + env_params["goal"]

    key = jax.random.PRNGKey(0)
    k_param, k_x, k_a = jax.random.split(key, 3)

    params = init_critic_params(k_param, obs_goal_dim, env_params["action"],
                                env_params["action_max"])

    x = jax.random.normal(k_x, (batch, obs_goal_dim), jnp.float32)
    actions = jax.random.normal(k_a, (batch, env_params["action"]), jnp.float32)

    # Plain (linear) head.
    q = critic_forward(x, actions, params, activation=None)
    q = jax.block_until_ready(q)
    assert q.shape == (batch, 1), q.shape
    q_ref = _critic_reference(x, actions, params, activation=None)
    assert bool(jnp.allclose(q, q_ref, atol=3e-2, rtol=3e-2)), (q, q_ref)

    # Sigmoid head (review: exercise this path too).
    qs = critic_forward(x, actions, params, activation="sigmoid")
    qs = jax.block_until_ready(qs)
    assert qs.shape == (batch, 1), qs.shape
    qs_ref = _critic_reference(x, actions, params, activation="sigmoid")
    assert bool(jnp.allclose(qs, qs_ref, atol=3e-2, rtol=3e-2)), (qs, qs_ref)

    print("KERNEL_OK")
</pallas_src>

<mosaic_0001>
module attributes {stable_mosaic.version = 11 : i64} {
  func.func @_critic_kernel(%arg0: i32, %arg1: memref<17x128xf32, #tpu.memory_space<vmem>>, %arg2: memref<256x17xbf16, #tpu.memory_space<vmem>>, %arg3: memref<256x1xf32, #tpu.memory_space<vmem>>, %arg4: memref<256x256xbf16, #tpu.memory_space<vmem>>, %arg5: memref<256x1xf32, #tpu.memory_space<vmem>>, %arg6: memref<256x256xbf16, #tpu.memory_space<vmem>>, %arg7: memref<256x1xf32, #tpu.memory_space<vmem>>, %arg8: memref<256x1xf32, #tpu.memory_space<vmem>>, %arg9: memref<1x1xf32, #tpu.memory_space<vmem>>, %arg10: memref<1x128xf32, #tpu.memory_space<vmem>>) attributes {dimension_semantics = [#tpu.dimension_semantics<parallel>], iteration_bounds = array<i64: 1>, scalar_prefetch = 0 : i64, scratch_operands = 0 : i64, tpu.core_type = #tpu.core_type<tc>, window_params = [{transform_indices = @transform_0, window_bounds = array<i64: 17, 128>}, {pipeline_mode = #tpu.pipeline_mode<synchronous>, transform_indices = @transform_1, window_bounds = array<i64: 256, 17>}, {pipeline_mode = #tpu.pipeline_mode<synchronous>, transform_indices = @transform_2, window_bounds = array<i64: 256, 1>}, {pipeline_mode = #tpu.pipeline_mode<synchronous>, transform_indices = @transform_3, window_bounds = array<i64: 256, 256>}, {pipeline_mode = #tpu.pipeline_mode<synchronous>, transform_indices = @transform_4, window_bounds = array<i64: 256, 1>}, {pipeline_mode = #tpu.pipeline_mode<synchronous>, transform_indices = @transform_5, window_bounds = array<i64: 256, 256>}, {pipeline_mode = #tpu.pipeline_mode<synchronous>, transform_indices = @transform_6, window_bounds = array<i64: 256, 1>}, {pipeline_mode = #tpu.pipeline_mode<synchronous>, transform_indices = @transform_7, window_bounds = array<i64: 256, 1>}, {pipeline_mode = #tpu.pipeline_mode<synchronous>, transform_indices = @transform_8, window_bounds = array<i64: 1, 1>}, {transform_indices = @transform_9, window_bounds = array<i64: 1, 128>}]} {
    %c0 = arith.constant 0 : index
    %c0_0 = arith.constant 0 : index
    %0 = vector.load %arg1[%c0, %c0_0] : memref<17x128xf32, #tpu.memory_space<vmem>>, vector<17x128xf32>
    %1 = arith.truncf %0 : vector<17x128xf32> to vector<17x128xbf16>
    %c0_1 = arith.constant 0 : index
    %c0_2 = arith.constant 0 : index
    %2 = vector.load %arg2[%c0_1, %c0_2] : memref<256x17xbf16, #tpu.memory_space<vmem>>, vector<256x17xbf16>
    %cst = arith.constant dense<0.000000e+00> : vector<256x128xf32>
    %3 = tpu.matmul %2, %1, %cst {dimension_numbers = #tpu.dot_dimension_numbers<[1], [0], [0], [1], [0, 0, 1, 1], [], []>} : vector<256x17xbf16>, vector<17x128xbf16>, vector<256x128xf32> -> vector<256x128xf32>
    %c0_3 = arith.constant 0 : index
    %c0_4 = arith.constant 0 : index
    %4 = vector.load %arg3[%c0_3, %c0_4] : memref<256x1xf32, #tpu.memory_space<vmem>>, vector<256x1xf32>
    %5 = vector.broadcast %4 : vector<256x1xf32> to vector<256x128xf32>
    %6 = arith.addf %3, %5 : vector<256x128xf32>
    %cst_5 = arith.constant 0.000000e+00 : f32
    %7 = vector.broadcast %cst_5 : f32 to vector<256x128xf32>
    %8 = arith.maximumf %6, %7 : vector<256x128xf32>
    %c0_6 = arith.constant 0 : index
    %c0_7 = arith.constant 0 : index
    %9 = vector.load %arg4[%c0_6, %c0_7] : memref<256x256xbf16, #tpu.memory_space<vmem>>, vector<256x256xbf16>
    %10 = arith.truncf %8 : vector<256x128xf32> to vector<256x128xbf16>
    %cst_8 = arith.constant dense<0.000000e+00> : vector<256x128xf32>
    %11 = tpu.matmul %9, %10, %cst_8 {dimension_numbers = #tpu.dot_dimension_numbers<[1], [0], [0], [1], [0, 0, 1, 1], [], []>} : vector<256x256xbf16>, vector<256x128xbf16>, vector<256x128xf32> -> vector<256x128xf32>
    %c0_9 = arith.constant 0 : index
    %c0_10 = arith.constant 0 : index
    %12 = vector.load %arg5[%c0_9, %c0_10] : memref<256x1xf32, #tpu.memory_space<vmem>>, vector<256x1xf32>
    %13 = vector.broadcast %12 : vector<256x1xf32> to vector<256x128xf32>
    %14 = arith.addf %11, %13 : vector<256x128xf32>
    %cst_11 = arith.constant 0.000000e+00 : f32
    %15 = vector.broadcast %cst_11 : f32 to vector<256x128xf32>
    %16 = arith.maximumf %14, %15 : vector<256x128xf32>
    %c0_12 = arith.constant 0 : index
    %c0_13 = arith.constant 0 : index
    %17 = vector.load %arg6[%c0_12, %c0_13] : memref<256x256xbf16, #tpu.memory_space<vmem>>, vector<256x256xbf16>
    %18 = arith.truncf %16 : vector<256x128xf32> to vector<256x128xbf16>
    %cst_14 = arith.constant dense<0.000000e+00> : vector<256x128xf32>
    %19 = tpu.matmul %17, %18, %cst_14 {dimension_numbers = #tpu.dot_dimension_numbers<[1], [0], [0], [1], [0, 0, 1, 1], [], []>} : vector<256x256xbf16>, vector<256x128xbf16>, vector<256x128xf32> -> vector<256x128xf32>
    %c0_15 = arith.constant 0 : index
    %c0_16 = arith.constant 0 : index
    %20 = vector.load %arg7[%c0_15, %c0_16] : memref<256x1xf32, #tpu.memory_space<vmem>>, vector<256x1xf32>
    %21 = vector.broadcast %20 : vector<256x1xf32> to vector<256x128xf32>
    %22 = arith.addf %19, %21 : vector<256x128xf32>
    %cst_17 = arith.constant 0.000000e+00 : f32
    %23 = vector.broadcast %cst_17 : f32 to vector<256x128xf32>
    %24 = arith.maximumf %22, %23 : vector<256x128xf32>
    %c0_18 = arith.constant 0 : index
    %c0_19 = arith.constant 0 : index
    %25 = vector.load %arg8[%c0_18, %c0_19] : memref<256x1xf32, #tpu.memory_space<vmem>>, vector<256x1xf32>
    %26 = vector.broadcast %25 : vector<256x1xf32> to vector<256x128xf32>
    %27 = arith.mulf %24, %26 : vector<256x128xf32>
    %cst_20 = arith.constant dense<0.000000e+00> : vector<128xf32>
    %28 = vector.multi_reduction <add>, %27, %cst_20 [0] : vector<256x128xf32> to vector<128xf32>
    %29 = vector.shape_cast %28 : vector<128xf32> to vector<1x128xf32>
    %c0_21 = arith.constant 0 : index
    %c0_22 = arith.constant 0 : index
    %30 = vector.load %arg9[%c0_21, %c0_22] : memref<1x1xf32, #tpu.memory_space<vmem>>, vector<1x1xf32>
    %31 = vector.broadcast %30 : vector<1x1xf32> to vector<1x128xf32>
    %32 = arith.addf %29, %31 : vector<1x128xf32>
    %c0_23 = arith.constant 0 : index
    %c0_24 = arith.constant 0 : index
    %33 = vector.load %arg10[%c0_23, %c0_24] : memref<1x128xf32, #tpu.memory_space<vmem>>, vector<1x128xf32>
    tpu.vector_store %arg10[%c0_23, %c0_24], %32 {strides = array<i32>} : memref<1x128xf32, #tpu.memory_space<vmem>>, vector<1x128xf32>,
    return
  }
  func.func @transform_0(%arg0: i32) -> (i32, i32) {
    %c0_i32 = arith.constant 0 : i32
    %c0_i32_0 = arith.constant 0 : i32
    return %c0_i32, %arg0 : i32, i32
  }
  func.func @transform_1(%arg0: i32) -> (i32, i32) {
    %c0_i32 = arith.constant 0 : i32
    %c0_i32_0 = arith.constant 0 : i32
    %c0_i32_1 = arith.constant 0 : i32
    return %c0_i32, %c0_i32_0 : i32, i32
  }
  func.func @transform_2(%arg0: i32) -> (i32, i32) {
    %c0_i32 = arith.constant 0 : i32
    %c0_i32_0 = arith.constant 0 : i32
    %c0_i32_1 = arith.constant 0 : i32
    return %c0_i32, %c0_i32_0 : i32, i32
  }
  func.func @transform_3(%arg0: i32) -> (i32, i32) {
    %c0_i32 = arith.constant 0 : i32
    %c0_i32_0 = arith.constant 0 : i32
    %c0_i32_1 = arith.constant 0 : i32
    return %c0_i32, %c0_i32_0 : i32, i32
  }
  func.func @transform_4(%arg0: i32) -> (i32, i32) {
    %c0_i32 = arith.constant 0 : i32
    %c0_i32_0 = arith.constant 0 : i32
    %c0_i32_1 = arith.constant 0 : i32
    return %c0_i32, %c0_i32_0 : i32, i32
  }
  func.func @transform_5(%arg0: i32) -> (i32, i32) {
    %c0_i32 = arith.constant 0 : i32
    %c0_i32_0 = arith.constant 0 : i32
    %c0_i32_1 = arith.constant 0 : i32
    return %c0_i32, %c0_i32_0 : i32, i32
  }
  func.func @transform_6(%arg0: i32) -> (i32, i32) {
    %c0_i32 = arith.constant 0 : i32
    %c0_i32_0 = arith.constant 0 : i32
    %c0_i32_1 = arith.constant 0 : i32
    return %c0_i32, %c0_i32_0 : i32, i32
  }
  func.func @transform_7(%arg0: i32) -> (i32, i32) {
    %c0_i32 = arith.constant 0 : i32
    %c0_i32_0 = arith.constant 0 : i32
    %c0_i32_1 = arith.constant 0 : i32
    return %c0_i32, %c0_i32_0 : i32, i32
  }
  func.func @transform_8(%arg0: i32) -> (i32, i32) {
    %c0_i32 = arith.constant 0 : i32
    %c0_i32_0 = arith.constant 0 : i32
    %c0_i32_1 = arith.constant 0 : i32
    return %c0_i32, %c0_i32_0 : i32, i32
  }
  func.func @transform_9(%arg0: i32) -> (i32, i32) {
    %c0_i32 = arith.constant 0 : i32
    %c0_i32_0 = arith.constant 0 : i32
    return %c0_i32, %arg0 : i32, i32
  }
}

</mosaic_0001>

<llo_original>
// kernel: critic_forward.1
$region0: #{critic_forward.1}
  #allocation0 [shape = 'u32[]', space=smem, size = 0x4, offset = 0x4, fixed_abs, tag = 'smem constant byte address 0x4 - core index']
  #allocation1 [shape = 'u32[144,128]{1,0:T(1,128)}', space=vmem, size = 0x12000, scoped, tag = 'internal scratch']
  #allocation2 [shape = 'f32[1,1]{1,0:T(1,128)S(1)}', space=vmem, size = 0x200, scoped, tag = 'scoped memory for critic_forward.1']
  %s0 = inlined_call_operand.vmem [shape: f32[17,128], index: 0, kind: input, shape index: {}]
  %s1 = inlined_call_operand.vmem [shape: bf16[256,17], index: 1, kind: input, shape index: {}]
  %s2 = inlined_call_operand.vmem [shape: f32[256,1], index: 2, kind: input, shape index: {}]
  %s3 = inlined_call_operand.vmem [shape: bf16[256,256], index: 3, kind: input, shape index: {}]
  %s4 = inlined_call_operand.vmem [shape: f32[256,1], index: 4, kind: input, shape index: {}]
  %s5 = inlined_call_operand.vmem [shape: bf16[256,256], index: 5, kind: input, shape index: {}]
  %s6 = inlined_call_operand.vmem [shape: f32[256,1], index: 6, kind: input, shape index: {}]
  %s7 = inlined_call_operand.vmem [shape: f32[256,1], index: 7, kind: input, shape index: {}]
  %s8 = inlined_call_operand.<no memory space> [shape: f32[1,1], index: 8, kind: input, shape index: {}]
  %s9 = inlined_call_operand.vmem [shape: f32[1,128], index: 9, kind: output, shape index: {}]
  %s10 = sld [smem:[#allocation0]]
  $region46: #{critic_forward.1} parent=0
    _
  %s12 = ssub.s32 1, %s10
  %s13 = scalar_select 0, %s12, %s10
  %v14 = vstv %s8
  %15 = vst [vmem:[#allocation2] sm:$0x1] %v14
  // Predicated region
  $region2: #{critic_forward.1} parent=0 // pred_check
    _
  $region3: #{critic_forward.1} parent=0 // pred_check_branch
    %17 = sbr.rel (0) target = $region5
  $region4: #{critic_forward.1} parent=0 // pred_region
    _
  $region5: #{critic_forward.1} parent=0 // pred_fallthru
    _
  // Predicated region
  $region6: #{critic_forward.1} parent=0 // pred_check
    _
  $region7: #{critic_forward.1} parent=0 // pred_check_branch
    %19 = sbr.rel (0) target = $region9
  $region8: #{critic_forward.1} parent=0 // pred_region
    _
  $region9: #{critic_forward.1} parent=0 // pred_fallthru
    _
  // Predicated region
  $region10: #{critic_forward.1} parent=0 // pred_check
    _
  $region11: #{critic_forward.1} parent=0 // pred_check_branch
    %21 = sbr.rel (0) target = $region13
  $region12: #{critic_forward.1} parent=0 // pred_region
    _
  $region13: #{critic_forward.1} parent=0 // pred_fallthru
    _
  // Predicated region
  $region14: #{critic_forward.1} parent=0 // pred_check
    _
  $region15: #{critic_forward.1} parent=0 // pred_check_branch
    %23 = sbr.rel (0) target = $region17
  $region16: #{critic_forward.1} parent=0 // pred_region
    _
  $region17: #{critic_forward.1} parent=0 // pred_fallthru
    _
  // Predicated region
  $region18: #{critic_forward.1} parent=0 // pred_check
    _
  $region19: #{critic_forward.1} parent=0 // pred_check_branch
    %25 = sbr.rel (0) target = $region21
  $region20: #{critic_forward.1} parent=0 // pred_region
    _
  $region21: #{critic_forward.1} parent=0 // pred_fallthru
    _
  // Predicated region
  $region22: #{critic_forward.1} parent=0 // pred_check
    _
  $region23: #{critic_forward.1} parent=0 // pred_check_branch
    %27 = sbr.rel (0) target = $region25
  $region24: #{critic_forward.1} parent=0 // pred_region
    _
  $region25: #{critic_forward.1} parent=0 // pred_fallthru
    _
  // Predicated region
  $region26: #{critic_forward.1} parent=0 // pred_check
    _
  $region27: #{critic_forward.1} parent=0 // pred_check_branch
    %29 = sbr.rel (0) target = $region29
  $region28: #{critic_forward.1} parent=0 // pred_region
    _
  $region29: #{critic_forward.1} parent=0 // pred_fallthru
    _
  // Predicated region
  $region30: #{critic_forward.1} parent=0 // pred_check
    _
  $region31: #{critic_forward.1} parent=0 // pred_check_branch
    %31 = sbr.rel (0) target = $region33
  $region32: #{critic_forward.1} parent=0 // pred_region
    _
  $region33: #{critic_forward.1} parent=0 // pred_fallthru
    _
  // Predicated region
  $region34: #{critic_forward.1} parent=0 // pred_check
    _
  $region35: #{critic_forward.1} parent=0 // pred_check_branch
    %33 = sbr.rel (0) target = $region37
  $region36: #{critic_forward.1} parent=0 // pred_region
    _
  $region37: #{critic_forward.1} parent=0 // pred_fallthru
    _
  %v35 = vld [vmem:[%s0] sm:$0xff]
  %v36 = vld [vmem:[%s0 + $0x8] sm:$0xff]
  %v37 = vld [vmem:[%s0 + $0x10] sm:$0x1]
  %v38 = vpack.c.bf16 %v36, %v35
  %v39 = vpack.c.bf16 %v37, %v37
  %v40 = vld [vmem:[%s1] sm:$0xf]
  %v41 = vld [vmem:[%s1 + $0x4] sm:$0xf]
  %v42 = vld [vmem:[%s1 + $0x8] sm:$0xf]
  %v43 = vld [vmem:[%s1 + $0xc] sm:$0xf]
  %v44 = vld [vmem:[%s1 + $0x10] sm:$0xf]
  %v45 = vld [vmem:[%s1 + $0x14] sm:$0xf]
  %v46 = vld [vmem:[%s1 + $0x18] sm:$0xf]
  %v47 = vld [vmem:[%s1 + $0x1c] sm:$0xf]
  %v48 = vld [vmem:[%s1 + $0x20] sm:$0xf]
  %v49 = vld [vmem:[%s1 + $0x24] sm:$0xf]
  %v50 = vld [vmem:[%s1 + $0x28] sm:$0xf]
  %v51 = vld [vmem:[%s1 + $0x2c] sm:$0xf]
  %v52 = vld [vmem:[%s1 + $0x30] sm:$0xf]
  %v53 = vld [vmem:[%s1 + $0x34] sm:$0xf]
  %v54 = vld [vmem:[%s1 + $0x38] sm:$0xf]
  %v55 = vld [vmem:[%s1 + $0x3c] sm:$0xf]
  %v56 = vld [vmem:[%s1 + $0x40] sm:$0xf]
  %v57 = vld [vmem:[%s1 + $0x44] sm:$0xf]
  %v58 = vld [vmem:[%s1 + $0x48] sm:$0xf]
  %v59 = vld [vmem:[%s1 + $0x4c] sm:$0xf]
  %v60 = vld [vmem:[%s1 + $0x50] sm:$0xf]
  %v61 = vld [vmem:[%s1 + $0x54] sm:$0xf]
  %v62 = vld [vmem:[%s1 + $0x58] sm:$0xf]
  %v63 = vld [vmem:[%s1 + $0x5c] sm:$0xf]
  %v64 = vld [vmem:[%s1 + $0x60] sm:$0xf]
  %v65 = vld [vmem:[%s1 + $0x64] sm:$0xf]
  %v66 = vld [vmem:[%s1 + $0x68] sm:$0xf]
  %v67 = vld [vmem:[%s1 + $0x6c] sm:$0xf]
  %v68 = vld [vmem:[%s1 + $0x70] sm:$0xf]
  %v69 = vld [vmem:[%s1 + $0x74] sm:$0xf]
  %v70 = vld [vmem:[%s1 + $0x78] sm:$0xf]
  %v71 = vld [vmem:[%s1 + $0x7c] sm:$0xf]
  %v72 = vld [vmem:[%s2] sm:$0xff]
  %v73 = vld [vmem:[%s2 + $0x8] sm:$0xff]
  %v74 = vld [vmem:[%s2 + $0x10] sm:$0xff]
  %v75 = vld [vmem:[%s2 + $0x18] sm:$0xff]
  %v76 = vld [vmem:[%s2 + $0x20] sm:$0xff]
  %v77 = vld [vmem:[%s2 + $0x28] sm:$0xff]
  %v78 = vld [vmem:[%s2 + $0x30] sm:$0xff]
  %v79 = vld [vmem:[%s2 + $0x38] sm:$0xff]
  %v80 = vld [vmem:[%s2 + $0x40] sm:$0xff]
  %v81 = vld [vmem:[%s2 + $0x48] sm:$0xff]
  %v82 = vld [vmem:[%s2 + $0x50] sm:$0xff]
  %v83 = vld [vmem:[%s2 + $0x58] sm:$0xff]
  %v84 = vld [vmem:[%s2 + $0x60] sm:$0xff]
  %v85 = vld [vmem:[%s2 + $0x68] sm:$0xff]
  %v86 = vld [vmem:[%s2 + $0x70] sm:$0xff]
  %v87 = vld [vmem:[%s2 + $0x78] sm:$0xff]
  %v88 = vld [vmem:[%s2 + $0x80] sm:$0xff]
  %v89 = vld [vmem:[%s2 + $0x88] sm:$0xff]
  %v90 = vld [vmem:[%s2 + $0x90] sm:$0xff]
  %v91 = vld [vmem:[%s2 + $0x98] sm:$0xff]
  %v92 = vld [vmem:[%s2 + $0xa0] sm:$0xff]
  %v93 = vld [vmem:[%s2 + $0xa8] sm:$0xff]
  %v94 = vld [vmem:[%s2 + $0xb0] sm:$0xff]
  %v95 = vld [vmem:[%s2 + $0xb8] sm:$0xff]
  %v96 = vld [vmem:[%s2 + $0xc0] sm:$0xff]
  %v97 = vld [vmem:[%s2 + $0xc8] sm:$0xff]
  %v98 = vld [vmem:[%s2 + $0xd0] sm:$0xff]
  %v99 = vld [vmem:[%s2 + $0xd8] sm:$0xff]
  %v100 = vld [vmem:[%s2 + $0xe0] sm:$0xff]
  %v101 = vld [vmem:[%s2 + $0xe8] sm:$0xff]
  %v102 = vld [vmem:[%s2 + $0xf0] sm:$0xff]
  %v103 = vld [vmem:[%s2 + $0xf8] sm:$0xff]
  %105 = vset.pattern.permute.xlu0 0
  %106 = vperm.xlu0 %105, %v72
  %v107 = vpop.permute.xlu0 %106
  %110 = vset.pattern.permute.xlu0 0
  %111 = vperm.xlu0 %110, %v73
  %v112 = vpop.permute.xlu0 %111
  %115 = vset.pattern.permute.xlu0 0
  %116 = vperm.xlu0 %115, %v74
  %v117 = vpop.permute.xlu0 %116
  %120 = vset.pattern.permute.xlu0 0
  %121 = vperm.xlu0 %120, %v75
  %v122 = vpop.permute.xlu0 %121
  %125 = vset.pattern.permute.xlu0 0
  %126 = vperm.xlu0 %125, %v76
  %v127 = vpop.permute.xlu0 %126
  %130 = vset.pattern.permute.xlu0 0
  %131 = vperm.xlu0 %130, %v77
  %v132 = vpop.permute.xlu0 %131
  %135 = vset.pattern.permute.xlu0 0
  %136 = vperm.xlu0 %135, %v78
  %v137 = vpop.permute.xlu0 %136
  %140 = vset.pattern.permute.xlu0 0
  %141 = vperm.xlu0 %140, %v79
  %v142 = vpop.permute.xlu0 %141
  %145 = vset.pattern.permute.xlu0 0
  %146 = vperm.xlu0 %145, %v80
  %v147 = vpop.permute.xlu0 %146
  %150 = vset.pattern.permute.xlu0 0
  %151 = vperm.xlu0 %150, %v81
  %v152 = vpop.permute.xlu0 %151
  %155 = vset.pattern.permute.xlu0 0
  %156 = vperm.xlu0 %155, %v82
  %v157 = vpop.permute.xlu0 %156
  %160 = vset.pattern.permute.xlu0 0
  %161 = vperm.xlu0 %160, %v83
  %v162 = vpop.permute.xlu0 %161
  %165 = vset.pattern.permute.xlu0 0
  %166 = vperm.xlu0 %165, %v84
  %v167 = vpop.permute.xlu0 %166
  %170 = vset.pattern.permute.xlu0 0
  %171 = vperm.xlu0 %170, %v85
  %v172 = vpop.permute.xlu0 %171
  %175 = vset.pattern.permute.xlu0 0
  %176 = vperm.xlu0 %175, %v86
  %v177 = vpop.permute.xlu0 %176
  %180 = vset.pattern.permute.xlu0 0
  %181 = vperm.xlu0 %180, %v87
  %v182 = vpop.permute.xlu0 %181
  %185 = vset.pattern.permute.xlu0 0
  %186 = vperm.xlu0 %185, %v88
  %v187 = vpop.permute.xlu0 %186
  %190 = vset.pattern.permute.xlu0 0
  %191 = vperm.xlu0 %190, %v89
  %v192 = vpop.permute.xlu0 %191
  %195 = vset.pattern.permute.xlu0 0
  %196 = vperm.xlu0 %195, %v90
  %v197 = vpop.permute.xlu0 %196
  %200 = vset.pattern.permute.xlu0 0
  %201 = vperm.xlu0 %200, %v91
  %v202 = vpop.permute.xlu0 %201
  %205 = vset.pattern.permute.xlu0 0
  %206 = vperm.xlu0 %205, %v92
  %v207 = vpop.permute.xlu0 %206
  %210 = vset.pattern.permute.xlu0 0
  %211 = vperm.xlu0 %210, %v93
  %v212 = vpop.permute.xlu0 %211
  %215 = vset.pattern.permute.xlu0 0
  %216 = vperm.xlu0 %215, %v94
  %v217 = vpop.permute.xlu0 %216
  %220 = vset.pattern.permute.xlu0 0
  %221 = vperm.xlu0 %220, %v95
  %v222 = vpop.permute.xlu0 %221
  %225 = vset.pattern.permute.xlu0 0
  %226 = vperm.xlu0 %225, %v96
  %v227 = vpop.permute.xlu0 %226
  %230 = vset.pattern.permute.xlu0 0
  %231 = vperm.xlu0 %230, %v97
  %v232 = vpop.permute.xlu0 %231
  %235 = vset.pattern.permute.xlu0 0
  %236 = vperm.xlu0 %235, %v98
  %v237 = vpop.permute.xlu0 %236
  %240 = vset.pattern.permute.xlu0 0
  %241 = vperm.xlu0 %240, %v99
  %v242 = vpop.permute.xlu0 %241
  %245 = vset.pattern.permute.xlu0 0
  %246 = vperm.xlu0 %245, %v100
  %v247 = vpop.permute.xlu0 %246
  %250 = vset.pattern.permute.xlu0 0
  %251 = vperm.xlu0 %250, %v101
  %v252 = vpop.permute.xlu0 %251
  %255 = vset.pattern.permute.xlu0 0
  %256 = vperm.xlu0 %255, %v102
  %v257 = vpop.permute.xlu0 %256
  %260 = vset.pattern.permute.xlu0 0
  %261 = vperm.xlu0 %260, %v103
  %v262 = vpop.permute.xlu0 %261
  %v296 = vunpack.c.l.b16 %v40
  %v297 = vunpack.c.l.b16 %v41
  %v298 = vunpack.c.l.b16 %v42
  %v299 = vunpack.c.l.b16 %v43
  %v300 = vunpack.c.l.b16 %v44
  %v301 = vunpack.c.l.b16 %v45
  %v302 = vunpack.c.l.b16 %v46
  %v303 = vunpack.c.l.b16 %v47
  %v304 = vunpack.c.l.b16 %v48
  %v305 = vunpack.c.l.b16 %v49
  %v306 = vunpack.c.l.b16 %v50
  %v307 = vunpack.c.l.b16 %v51
  %v308 = vunpack.c.l.b16 %v52
  %v309 = vunpack.c.l.b16 %v53
  %v310 = vunpack.c.l.b16 %v54
  %v311 = vunpack.c.l.b16 %v55
  %v312 = vunpack.c.l.b16 %v56
  %v313 = vunpack.c.l.b16 %v57
  %v314 = vunpack.c.l.b16 %v58
  %v315 = vunpack.c.l.b16 %v59
  %v316 = vunpack.c.l.b16 %v60
  %v317 = vunpack.c.l.b16 %v61
  %v318 = vunpack.c.l.b16 %v62
  %v319 = vunpack.c.l.b16 %v63
  %v320 = vunpack.c.l.b16 %v64
  %v321 = vunpack.c.l.b16 %v65
  %v322 = vunpack.c.l.b16 %v66
  %v323 = vunpack.c.l.b16 %v67
  %v324 = vunpack.c.l.b16 %v68
  %v325 = vunpack.c.l.b16 %v69
  %v326 = vunpack.c.l.b16 %v70
  %v327 = vunpack.c.l.b16 %v71
  %v328 = vpack.c.b16 %v297, %v296
  %v329 = vpack.c.b16 %v299, %v298
  %v330 = vpack.c.b16 %v301, %v300
  %v331 = vpack.c.b16 %v303, %v302
  %v332 = vpack.c.b16 %v305, %v304
  %v333 = vpack.c.b16 %v307, %v306
  %v334 = vpack.c.b16 %v309, %v308
  %v335 = vpack.c.b16 %v311, %v310
  %v336 = vpack.c.b16 %v313, %v312
  %v337 = vpack.c.b16 %v315, %v314
  %v338 = vpack.c.b16 %v317, %v316
  %v339 = vpack.c.b16 %v319, %v318
  %v340 = vpack.c.b16 %v321, %v320
  %v341 = vpack.c.b16 %v323, %v322
  %v342 = vpack.c.b16 %v325, %v324
  %v343 = vpack.c.b16 %v327, %v326
  %vm344 = vcmask 138240
  %v346 = vsel %vm344, %v328, 0
  %v349 = vsel %vm344, %v329, 0
  %v352 = vsel %vm344, %v330, 0
  %v355 = vsel %vm344, %v331, 0
  %v358 = vsel %vm344, %v332, 0
  %v361 = vsel %vm344, %v333, 0
  %v364 = vsel %vm344, %v334, 0
  %v367 = vsel %vm344, %v335, 0
  %v370 = vsel %vm344, %v336, 0
  %v373 = vsel %vm344, %v337, 0
  %v376 = vsel %vm344, %v338, 0
  %v379 = vsel %vm344, %v339, 0
  %v382 = vsel %vm344, %v340, 0
  %v385 = vsel %vm344, %v341, 0
  %v388 = vsel %vm344, %v342, 0
  %v391 = vsel %vm344, %v343, 0
  %vm393 = vcmask 1040384
  %v394 = vsel 0, 4294967295, 65535
  %v395 = vsel %vm393, %v394, 0
  %v397 = vand.u32 %v39, %v395
  %399 = vmatprep.subr.bf16.mxu0 0
  %400 = vmatpush1.bf16.msra.mxu0 %v38
  %401 = vmatprep.subr.bf16.mxu0 0
  %402 = vmatpush1.bf16.msra.mxu0 %v397
  %403 = vmatprep.subr.bf16.mxu0 0
  %404 = vmatpush1.bf16.msra.mxu0 0
  %405 = vmatprep.subr.bf16.mxu0 0
  %406 = vmatpush1.bf16.msra.mxu0 0
  %407 = vmatprep.subr.bf16.mxu0 0
  %408 = vmatpush1.bf16.msra.mxu0 0
  %409 = vmatprep.subr.bf16.mxu0 0
  %410 = vmatpush1.bf16.msra.mxu0 0
  %411 = vmatprep.subr.bf16.mxu0 0
  %412 = vmatpush1.bf16.msra.mxu0 0
  %413 = vmatprep.subr.bf16.mxu0 0
  %414 = vmatpush1.bf16.msra.mxu0 0
  %415 = vmatprep.subr.bf16.mxu0 0
  %416 = vmatpush1.bf16.msra.mxu0 0
  %417 = vmatprep.subr.bf16.mxu0 0
  %418 = vmatpush1.bf16.msra.mxu0 0
  %419 = vmatprep.subr.bf16.mxu0 0
  %420 = vmatpush1.bf16.msra.mxu0 0
  %421 = vmatprep.subr.bf16.mxu0 0
  %422 = vmatpush1.bf16.msra.mxu0 0
  %423 = vmatprep.subr.bf16.mxu0 0
  %424 = vmatpush1.bf16.msra.mxu0 0
  %425 = vmatprep.subr.bf16.mxu0 0
  %426 = vmatpush1.bf16.msra.mxu0 0
  %427 = vmatprep.subr.bf16.mxu0 0
  %428 = vmatpush1.bf16.msra.mxu0 0
  %429 = vmatprep.subr.bf16.mxu0 0
  %430 = vmatpush1.bf16.msra.mxu0 0
  %431 = vmatprep.mubr.bf16.mxu0 0
  %432 = vmatmul.mubr.bf16.gmra.mrb[0].mxu0 %v346
  %v433 = vpop.f32.mrb[0].mxu0
  %v434 = vadd.f32 %v107, %v433
  %v435 = vpop.f32.mrb[0].mxu0
  %v436 = vpop.f32.mrb[0].mxu0
  %v437 = vadd.f32 %v112, %v436
  %v438 = vpop.f32.mrb[0].mxu0
  %439 = vmatprep.mubr.bf16.mxu0 0
  %440 = vmatmul.mubr.bf16.gmra.mrb[0].mxu0 %v349
  %v441 = vpop.f32.mrb[0].mxu0
  %v442 = vadd.f32 %v117, %v441
  %v443 = vpop.f32.mrb[0].mxu0
  %v444 = vpop.f32.mrb[0].mxu0
  %v445 = vadd.f32 %v122, %v444
  %v446 = vpop.f32.mrb[0].mxu0
  %447 = vmatprep.mubr.bf16.mxu0 0
  %448 = vmatmul.mubr.bf16.gmra.mrb[0].mxu0 %v352
  %v449 = vpop.f32.mrb[0].mxu0
  %v450 = vadd.f32 %v127, %v449
  %v451 = vpop.f32.mrb[0].mxu0
  %v452 = vpop.f32.mrb[0].mxu0
  %v453 = vadd.f32 %v132, %v452
  %v454 = vpop.f32.mrb[0].mxu0
  %455 = vmatprep.mubr.bf16.mxu0 0
  %456 = vmatmul.mubr.bf16.gmra.mrb[0].mxu0 %v355
  %v457 = vpop.f32.mrb[0].mxu0
  %v458 = vadd.f32 %v137, %v457
  %v459 = vpop.f32.mrb[0].mxu0
  %v460 = vpop.f32.mrb[0].mxu0
  %v461 = vadd.f32 %v142, %v460
  %v462 = vpop.f32.mrb[0].mxu0
  %463 = vmatprep.mubr.bf16.mxu0 0
  %464 = vmatmul.mubr.bf16.gmra.mrb[0].mxu0 %v358
  %v465 = vpop.f32.mrb[0].mxu0
  %v466 = vadd.f32 %v147, %v465
  %v467 = vpop.f32.mrb[0].mxu0
  %v468 = vpop.f32.mrb[0].mxu0
  %v469 = vadd.f32 %v152, %v468
  %v470 = vpop.f32.mrb[0].mxu0
  %471 = vmatprep.mubr.bf16.mxu0 0
  %472 = vmatmul.mubr.bf16.gmra.mrb[0].mxu0 %v361
  %v473 = vpop.f32.mrb[0].mxu0
  %v474 = vadd.f32 %v157, %v473
  %v475 = vpop.f32.mrb[0].mxu0
  %v476 = vpop.f32.mrb[0].mxu0
  %v477 = vadd.f32 %v162, %v476
  %v478 = vpop.f32.mrb[0].mxu0
  %479 = vmatprep.mubr.bf16.mxu0 0
  %480 = vmatmul.mubr.bf16.gmra.mrb[0].mxu0 %v364
  %v481 = vpop.f32.mrb[0].mxu0
  %v482 = vadd.f32 %v167, %v481
  %v483 = vpop.f32.mrb[0].mxu0
  %v484 = vpop.f32.mrb[0].mxu0
  %v485 = vadd.f32 %v172, %v484
  %v486 = vpop.f32.mrb[0].mxu0
  %487 = vmatprep.mubr.bf16.mxu0 0
  %488 = vmatmul.mubr.bf16.gmra.mrb[0].mxu0 %v367
  %v489 = vpop.f32.mrb[0].mxu0
  %v490 = vadd.f32 %v177, %v489
  %v491 = vpop.f32.mrb[0].mxu0
  %v492 = vpop.f32.mrb[0].mxu0
  %v493 = vadd.f32 %v182, %v492
  %v494 = vpop.f32.mrb[0].mxu0
  %495 = vmatprep.mubr.bf16.mxu0 0
  %496 = vmatmul.mubr.bf16.gmra.mrb[0].mxu0 %v370
  %v497 = vpop.f32.mrb[0].mxu0
  %v498 = vadd.f32 %v187, %v497
  %v499 = vpop.f32.mrb[0].mxu0
  %v500 = vpop.f32.mrb[0].mxu0
  %v501 = vadd.f32 %v192, %v500
  %v502 = vpop.f32.mrb[0].mxu0
  %503 = vmatprep.mubr.bf16.mxu0 0
  %504 = vmatmul.mubr.bf16.gmra.mrb[0].mxu0 %v373
  %v505 = vpop.f32.mrb[0].mxu0
  %v506 = vadd.f32 %v197, %v505
  %v507 = vpop.f32.mrb[0].mxu0
  %v508 = vpop.f32.mrb[0].mxu0
  %v509 = vadd.f32 %v202, %v508
  %v510 = vpop.f32.mrb[0].mxu0
  %511 = vmatprep.mubr.bf16.mxu0 0
  %512 = vmatmul.mubr.bf16.gmra.mrb[0].mxu0 %v376
  %v513 = vpop.f32.mrb[0].mxu0
  %v514 = vadd.f32 %v207, %v513
  %v515 = vpop.f32.mrb[0].mxu0
  %v516 = vpop.f32.mrb[0].mxu0
  %v517 = vadd.f32 %v212, %v516
  %v518 = vpop.f32.mrb[0].mxu0
  %519 = vmatprep.mubr.bf16.mxu0 0
  %520 = vmatmul.mubr.bf16.gmra.mrb[0].mxu0 %v379
  %v521 = vpop.f32.mrb[0].mxu0
  %v522 = vadd.f32 %v217, %v521
  %v523 = vpop.f32.mrb[0].mxu0
  %v524 = vpop.f32.mrb[0].mxu0
  %v525 = vadd.f32 %v222, %v524
  %v526 = vpop.f32.mrb[0].mxu0
  %527 = vmatprep.mubr.bf16.mxu0 0
  %528 = vmatmul.mubr.bf16.gmra.mrb[0].mxu0 %v382
  %v529 = vpop.f32.mrb[0].mxu0
  %v530 = vadd.f32 %v227, %v529
  %v531 = vpop.f32.mrb[0].mxu0
  %v532 = vpop.f32.mrb[0].mxu0
  %v533 = vadd.f32 %v232, %v532
  %v534 = vpop.f32.mrb[0].mxu0
  %535 = vmatprep.mubr.bf16.mxu0 0
  %536 = vmatmul.mubr.bf16.gmra.mrb[0].mxu0 %v385
  %v537 = vpop.f32.mrb[0].mxu0
  %v538 = vadd.f32 %v237, %v537
  %v539 = vpop.f32.mrb[0].mxu0
  %v540 = vpop.f32.mrb[0].mxu0
  %v541 = vadd.f32 %v242, %v540
  %v542 = vpop.f32.mrb[0].mxu0
  %543 = vmatprep.mubr.bf16.mxu0 0
  %544 = vmatmul.mubr.bf16.gmra.mrb[0].mxu0 %v388
  %v545 = vpop.f32.mrb[0].mxu0
  %v546 = vadd.f32 %v247, %v545
  %v547 = vpop.f32.mrb[0].mxu0
  %v548 = vpop.f32.mrb[0].mxu0
  %v549 = vadd.f32 %v252, %v548
  %v550 = vpop.f32.mrb[0].mxu0
  %551 = vmatprep.mubr.bf16.mxu0 0
  %552 = vmatmul.mubr.bf16.gmra.mrb[0].mxu0 %v391
  %v553 = vpop.f32.mrb[0].mxu0
  %v554 = vadd.f32 %v257, %v553
  %v555 = vpop.f32.mrb[0].mxu0
  %v556 = vpop.f32.mrb[0].mxu0
  %v557 = vadd.f32 %v262, %v556
  %v558 = vpop.f32.mrb[0].mxu0
  %559 = vdwg.mxu0
  %v560 = vmax.f32 %v434, 0.0
  %v561 = vmax.f32 %v437, 0.0
  %v562 = vmax.f32 %v442, 0.0
  %v563 = vmax.f32 %v445, 0.0
  %v564 = vmax.f32 %v450, 0.0
  %v565 = vmax.f32 %v453, 0.0
  %v566 = vmax.f32 %v458, 0.0
  %v567 = vmax.f32 %v461, 0.0
  %v568 = vmax.f32 %v466, 0.0
  %v569 = vmax.f32 %v469, 0.0
  %v570 = vmax.f32 %v474, 0.0
  %v571 = vmax.f32 %v477, 0.0
  %v572 = vmax.f32 %v482, 0.0
  %v573 = vmax.f32 %v485, 0.0
  %v574 = vmax.f32 %v490, 0.0
  %v575 = vmax.f32 %v493, 0.0
  %v576 = vmax.f32 %v498, 0.0
  %v577 = vmax.f32 %v501, 0.0
  %v578 = vmax.f32 %v506, 0.0
  %v579 = vmax.f32 %v509, 0.0
  %v580 = vmax.f32 %v514, 0.0
  %v581 = vmax.f32 %v517, 0.0
  %v582 = vmax.f32 %v522, 0.0
  %v583 = vmax.f32 %v525, 0.0
  %v584 = vmax.f32 %v530, 0.0
  %v585 = vmax.f32 %v533, 0.0
  %v586 = vmax.f32 %v538, 0.0
  %v587 = vmax.f32 %v541, 0.0
  %v588 = vmax.f32 %v546, 0.0
  %v589 = vmax.f32 %v549, 0.0
  %v590 = vmax.f32 %v554, 0.0
  %v591 = vmax.f32 %v557, 0.0
  %v592 = vld [vmem:[%s3] sm:$0xff]
  %v593 = vld [vmem:[%s3 + $0x8] sm:$0xff]
  %v594 = vld [vmem:[%s3 + $0x10] sm:$0xff]
  %v595 = vld [vmem:[%s3 + $0x18] sm:$0xff]
  %v596 = vld [vmem:[%s3 + $0x20] sm:$0xff]
  %v597 = vld [vmem:[%s3 + $0x28] sm:$0xff]
  %v598 = vld [vmem:[%s3 + $0x30] sm:$0xff]
  %v599 = vld [vmem:[%s3 + $0x38] sm:$0xff]
  %v600 = vld [vmem:[%s3 + $0x40] sm:$0xff]
  %v601 = vld [vmem:[%s3 + $0x48] sm:$0xff]
  %v602 = vld [vmem:[%s3 + $0x50] sm:$0xff]
  %v603 = vld [vmem:[%s3 + $0x58] sm:$0xff]
  %v604 = vld [vmem:[%s3 + $0x60] sm:$0xff]
  %v605 = vld [vmem:[%s3 + $0x68] sm:$0xff]
  %v606 = vld [vmem:[%s3 + $0x70] sm:$0xff]
  %v607 = vld [vmem:[%s3 + $0x78] sm:$0xff]
  %v608 = vld [vmem:[%s3 + $0x80] sm:$0xff]
  %v609 = vld [vmem:[%s3 + $0x88] sm:$0xff]
  %v610 = vld [vmem:[%s3 + $0x90] sm:$0xff]
  %v611 = vld [vmem:[%s3 + $0x98] sm:$0xff]
  %v612 = vld [vmem:[%s3 + $0xa0] sm:$0xff]
  %v613 = vld [vmem:[%s3 + $0xa8] sm:$0xff]
  %v614 = vld [vmem:[%s3 + $0xb0] sm:$0xff]
  %v615 = vld [vmem:[%s3 + $0xb8] sm:$0xff]
  %v616 = vld [vmem:[%s3 + $0xc0] sm:$0xff]
  %v617 = vld [vmem:[%s3 + $0xc8] sm:$0xff]
  %v618 = vld [vmem:[%s3 + $0xd0] sm:$0xff]
  %v619 = vld [vmem:[%s3 + $0xd8] sm:$0xff]
  %v620 = vld [vmem:[%s3 + $0xe0] sm:$0xff]
  %v621 = vld [vmem:[%s3 + $0xe8] sm:$0xff]
  %v622 = vld [vmem:[%s3 + $0xf0] sm:$0xff]
  %v623 = vld [vmem:[%s3 + $0xf8] sm:$0xff]
  %v624 = vpack.c.bf16 %v561, %v560
  %v625 = vpack.c.bf16 %v563, %v562
  %v626 = vpack.c.bf16 %v565, %v564
  %v627 = vpack.c.bf16 %v567, %v566
  %v628 = vpack.c.bf16 %v569, %v568
  %v629 = vpack.c.bf16 %v571, %v570
  %v630 = vpack.c.bf16 %v573, %v572
  %v631 = vpack.c.bf16 %v575, %v574
  %v632 = vpack.c.bf16 %v577, %v576
  %v633 = vpack.c.bf16 %v579, %v578
  %v634 = vpack.c.bf16 %v581, %v580
  %v635 = vpack.c.bf16 %v583, %v582
  %v636 = vpack.c.bf16 %v585, %v584
  %v637 = vpack.c.bf16 %v587, %v586
  %v638 = vpack.c.bf16 %v589, %v588
  %v639 = vpack.c.bf16 %v591, %v590
  %v640 = vld [vmem:[%s4] sm:$0xff]
  %v641 = vld [vmem:[%s4 + $0x8] sm:$0xff]
  %v642 = vld [vmem:[%s4 + $0x10] sm:$0xff]
  %v643 = vld [vmem:[%s4 + $0x18] sm:$0xff]
  %v644 = vld [vmem:[%s4 + $0x20] sm:$0xff]
  %v645 = vld [vmem:[%s4 + $0x28] sm:$0xff]
  %v646 = vld [vmem:[%s4 + $0x30] sm:$0xff]
  %v647 = vld [vmem:[%s4 + $0x38] sm:$0xff]
  %v648 = vld [vmem:[%s4 + $0x40] sm:$0xff]
  %v649 = vld [vmem:[%s4 + $0x48] sm:$0xff]
  %v650 = vld [vmem:[%s4 + $0x50] sm:$0xff]
  %v651 = vld [vmem:[%s4 + $0x58] sm:$0xff]
  %v652 = vld [vmem:[%s4 + $0x60] sm:$0xff]
  %v653 = vld [vmem:[%s4 + $0x68] sm:$0xff]
  %v654 = vld [vmem:[%s4 + $0x70] sm:$0xff]
  %v655 = vld [vmem:[%s4 + $0x78] sm:$0xff]
  %v656 = vld [vmem:[%s4 + $0x80] sm:$0xff]
  %v657 = vld [vmem:[%s4 + $0x88] sm:$0xff]
  %v658 = vld [vmem:[%s4 + $0x90] sm:$0xff]
  %v659 = vld [vmem:[%s4 + $0x98] sm:$0xff]
  %v660 = vld [vmem:[%s4 + $0xa0] sm:$0xff]
  %v661 = vld [vmem:[%s4 + $0xa8] sm:$0xff]
  %v662 = vld [vmem:[%s4 + $0xb0] sm:$0xff]
  %v663 = vld [vmem:[%s4 + $0xb8] sm:$0xff]
  %v664 = vld [vmem:[%s4 + $0xc0] sm:$0xff]
  %v665 = vld [vmem:[%s4 + $0xc8] sm:$0xff]
  %v666 = vld [vmem:[%s4 + $0xd0] sm:$0xff]
  %v667 = vld [vmem:[%s4 + $0xd8] sm:$0xff]
  %v668 = vld [vmem:[%s4 + $0xe0] sm:$0xff]
  %v669 = vld [vmem:[%s4 + $0xe8] sm:$0xff]
  %v670 = vld [vmem:[%s4 + $0xf0] sm:$0xff]
  %v671 = vld [vmem:[%s4 + $0xf8] sm:$0xff]
  %673 = vset.pattern.permute.xlu0 0
  %674 = vperm.xlu0 %673, %v640
  %v675 = vpop.permute.xlu0 %674
  %678 = vset.pattern.permute.xlu0 0
  %679 = vperm.xlu0 %678, %v641
  %v680 = vpop.permute.xlu0 %679
  %683 = vset.pattern.permute.xlu0 0
  %684 = vperm.xlu0 %683, %v642
  %v685 = vpop.permute.xlu0 %684
  %688 = vset.pattern.permute.xlu0 0
  %689 = vperm.xlu0 %688, %v643
  %v690 = vpop.permute.xlu0 %689
  %693 = vset.pattern.permute.xlu0 0
  %694 = vperm.xlu0 %693, %v644
  %v695 = vpop.permute.xlu0 %694
  %698 = vset.pattern.permute.xlu0 0
  %699 = vperm.xlu0 %698, %v645
  %v700 = vpop.permute.xlu0 %699
  %703 = vset.pattern.permute.xlu0 0
  %704 = vperm.xlu0 %703, %v646
  %v705 = vpop.permute.xlu0 %704
  %708 = vset.pattern.permute.xlu0 0
  %709 = vperm.xlu0 %708, %v647
  %v710 = vpop.permute.xlu0 %709
  %713 = vset.pattern.permute.xlu0 0
  %714 = vperm.xlu0 %713, %v648
  %v715 = vpop.permute.xlu0 %714
  %718 = vset.pattern.permute.xlu0 0
  %719 = vperm.xlu0 %718, %v649
  %v720 = vpop.permute.xlu0 %719
  %723 = vset.pattern.permute.xlu0 0
  %724 = vperm.xlu0 %723, %v650
  %v725 = vpop.permute.xlu0 %724
  %728 = vset.pattern.permute.xlu0 0
  %729 = vperm.xlu0 %728, %v651
  %v730 = vpop.permute.xlu0 %729
  %733 = vset.pattern.permute.xlu0 0
  %734 = vperm.xlu0 %733, %v652
  %v735 = vpop.permute.xlu0 %734
  %738 = vset.pattern.permute.xlu0 0
  %739 = vperm.xlu0 %738, %v653
  %v740 = vpop.permute.xlu0 %739
  %743 = vset.pattern.permute.xlu0 0
  %744 = vperm.xlu0 %743, %v654
  %v745 = vpop.permute.xlu0 %744
  %748 = vset.pattern.permute.xlu0 0
  %749 = vperm.xlu0 %748, %v655
  %v750 = vpop.permute.xlu0 %749
  %753 = vset.pattern.permute.xlu0 0
  %754 = vperm.xlu0 %753, %v656
  %v755 = vpop.permute.xlu0 %754
  %758 = vset.pattern.permute.xlu0 0
  %759 = vperm.xlu0 %758, %v657
  %v760 = vpop.permute.xlu0 %759
  %763 = vset.pattern.permute.xlu0 0
  %764 = vperm.xlu0 %763, %v658
  %v765 = vpop.permute.xlu0 %764
  %768 = vset.pattern.permute.xlu0 0
  %769 = vperm.xlu0 %768, %v659
  %v770 = vpop.permute.xlu0 %769
  %773 = vset.pattern.permute.xlu0 0
  %774 = vperm.xlu0 %773, %v660
  %v775 = vpop.permute.xlu0 %774
  %778 = vset.pattern.permute.xlu0 0
  %779 = vperm.xlu0 %778, %v661
  %v780 = vpop.permute.xlu0 %779
  %783 = vset.pattern.permute.xlu0 0
  %784 = vperm.xlu0 %783, %v662
  %v785 = vpop.permute.xlu0 %784
  %788 = vset.pattern.permute.xlu0 0
  %789 = vperm.xlu0 %788, %v663
  %v790 = vpop.permute.xlu0 %789
  %793 = vset.pattern.permute.xlu0 0
  %794 = vperm.xlu0 %793, %v664
  %v795 = vpop.permute.xlu0 %794
  %798 = vset.pattern.permute.xlu0 0
  %799 = vperm.xlu0 %798, %v665
  %v800 = vpop.permute.xlu0 %799
  %803 = vset.pattern.permute.xlu0 0
  %804 = vperm.xlu0 %803, %v666
  %v805 = vpop.permute.xlu0 %804
  %808 = vset.pattern.permute.xlu0 0
  %809 = vperm.xlu0 %808, %v667
  %v810 = vpop.permute.xlu0 %809
  %813 = vset.pattern.permute.xlu0 0
  %814 = vperm.xlu0 %813, %v668
  %v815 = vpop.permute.xlu0 %814
  %818 = vset.pattern.permute.xlu0 0
  %819 = vperm.xlu0 %818, %v669
  %v820 = vpop.permute.xlu0 %819
  %823 = vset.pattern.permute.xlu0 0
  %824 = vperm.xlu0 %823, %v670
  %v825 = vpop.permute.xlu0 %824
  %828 = vset.pattern.permute.xlu0 0
  %829 = vperm.xlu0 %828, %v671
  %v830 = vpop.permute.xlu0 %829
  %v864 = vunpack.c.l.b16 %v592
  %v865 = vunpack.c.h.b16 %v592
  %v866 = vunpack.c.l.b16 %v593
  %v867 = vunpack.c.h.b16 %v593
  %v868 = vunpack.c.l.b16 %v594
  %v869 = vunpack.c.h.b16 %v594
  %v870 = vunpack.c.l.b16 %v595
  %v871 = vunpack.c.h.b16 %v595
  %v872 = vunpack.c.l.b16 %v596
  %v873 = vunpack.c.h.b16 %v596
  %v874 = vunpack.c.l.b16 %v597
  %v875 = vunpack.c.h.b16 %v597
  %v876 = vunpack.c.l.b16 %v598
  %v877 = vunpack.c.h.b16 %v598
  %v878 = vunpack.c.l.b16 %v599
  %v879 = vunpack.c.h.b16 %v599
  %v880 = vunpack.c.l.b16 %v600
  %v881 = vunpack.c.h.b16 %v600
  %v882 = vunpack.c.l.b16 %v601
  %v883 = vunpack.c.h.b16 %v601
  %v884 = vunpack.c.l.b16 %v602
  %v885 = vunpack.c.h.b16 %v602
  %v886 = vunpack.c.l.b16 %v603
  %v887 = vunpack.c.h.b16 %v603
  %v888 = vunpack.c.l.b16 %v604
  %v889 = vunpack.c.h.b16 %v604
  %v890 = vunpack.c.l.b16 %v605
  %v891 = vunpack.c.h.b16 %v605
  %v892 = vunpack.c.l.b16 %v606
  %v893 = vunpack.c.h.b16 %v606
  %v894 = vunpack.c.l.b16 %v607
  %v895 = vunpack.c.h.b16 %v607
  %v896 = vunpack.c.l.b16 %v608
  %v897 = vunpack.c.h.b16 %v608
  %v898 = vunpack.c.l.b16 %v609
  %v899 = vunpack.c.h.b16 %v609
  %v900 = vunpack.c.l.b16 %v610
  %v901 = vunpack.c.h.b16 %v610
  %v902 = vunpack.c.l.b16 %v611
  %v903 = vunpack.c.h.b16 %v611
  %v904 = vunpack.c.l.b16 %v612
  %v905 = vunpack.c.h.b16 %v612
  %v906 = vunpack.c.l.b16 %v613
  %v907 = vunpack.c.h.b16 %v613
  %v908 = vunpack.c.l.b16 %v614
  %v909 = vunpack.c.h.b16 %v614
  %v910 = vunpack.c.l.b16 %v615
  %v911 = vunpack.c.h.b16 %v615
  %v912 = vunpack.c.l.b16 %v616
  %v913 = vunpack.c.h.b16 %v616
  %v914 = vunpack.c.l.b16 %v617
  %v915 = vunpack.c.h.b16 %v617
  %v916 = vunpack.c.l.b16 %v618
  %v917 = vunpack.c.h.b16 %v618
  %v918 = vunpack.c.l.b16 %v619
  %v919 = vunpack.c.h.b16 %v619
  %v920 = vunpack.c.l.b16 %v620
  %v921 = vunpack.c.h.b16 %v620
  %v922 = vunpack.c.l.b16 %v621
  %v923 = vunpack.c.h.b16 %v621
  %v924 = vunpack.c.l.b16 %v622
  %v925 = vunpack.c.h.b16 %v622
  %v926 = vunpack.c.l.b16 %v623
  %v927 = vunpack.c.h.b16 %v623
  %v928 = vpack.c.b16 %v866, %v864
  %v929 = vpack.c.b16 %v867, %v865
  %v930 = vpack.c.b16 %v870, %v868
  %v931 = vpack.c.b16 %v871, %v869
  %v932 = vpack.c.b16 %v874, %v872
  %v933 = vpack.c.b16 %v875, %v873
  %v934 = vpack.c.b16 %v878, %v876
  %v935 = vpack.c.b16 %v879, %v877
  %v936 = vpack.c.b16 %v882, %v880
  %v937 = vpack.c.b16 %v883, %v881
  %v938 = vpack.c.b16 %v886, %v884
  %v939 = vpack.c.b16 %v887, %v885
  %v940 = vpack.c.b16 %v890, %v888
  %v941 = vpack.c.b16 %v891, %v889
  %v942 = vpack.c.b16 %v894, %v892
  %v943 = vpack.c.b16 %v895, %v893
  %v944 = vpack.c.b16 %v898, %v896
  %v945 = vpack.c.b16 %v899, %v897
  %v946 = vpack.c.b16 %v902, %v900
  %v947 = vpack.c.b16 %v903, %v901
  %v948 = vpack.c.b16 %v906, %v904
  %v949 = vpack.c.b16 %v907, %v905
  %v950 = vpack.c.b16 %v910, %v908
  %v951 = vpack.c.b16 %v911, %v909
  %v952 = vpack.c.b16 %v914, %v912
  %v953 = vpack.c.b16 %v915, %v913
  %v954 = vpack.c.b16 %v918, %v916
  %v955 = vpack.c.b16 %v919, %v917
  %v956 = vpack.c.b16 %v922, %v920
  %v957 = vpack.c.b16 %v923, %v921
  %v958 = vpack.c.b16 %v926, %v924
  %v959 = vpack.c.b16 %v927, %v925
  %992 = vmatprep.subr.bf16.mxu0 0
  %993 = vmatpush1.bf16.msra.mxu0 %v624
  %994 = vmatprep.subr.bf16.mxu0 0
  %995 = vmatpush1.bf16.msra.mxu0 %v625
  %996 = vmatprep.subr.bf16.mxu0 0
  %997 = vmatpush1.bf16.msra.mxu0 %v626
  %998 = vmatprep.subr.bf16.mxu0 0
  %999 = vmatpush1.bf16.msra.mxu0 %v627
  %1000 = vmatprep.subr.bf16.mxu0 0
  %1001 = vmatpush1.bf16.msra.mxu0 %v628
  %1002 = vmatprep.subr.bf16.mxu0 0
  %1003 = vmatpush1.bf16.msra.mxu0 %v629
  %1004 = vmatprep.subr.bf16.mxu0 0
  %1005 = vmatpush1.bf16.msra.mxu0 %v630
  %1006 = vmatprep.subr.bf16.mxu0 0
  %1007 = vmatpush1.bf16.msra.mxu0 %v631
  %1008 = vmatprep.subr.bf16.mxu0 0
  %1009 = vmatpush1.bf16.msra.mxu0 %v632
  %1010 = vmatprep.subr.bf16.mxu0 0
  %1011 = vmatpush1.bf16.msra.mxu0 %v633
  %1012 = vmatprep.subr.bf16.mxu0 0
  %1013 = vmatpush1.bf16.msra.mxu0 %v634
  %1014 = vmatprep.subr.bf16.mxu0 0
  %1015 = vmatpush1.bf16.msra.mxu0 %v635
  %1016 = vmatprep.subr.bf16.mxu0 0
  %1017 = vmatpush1.bf16.msra.mxu0 %v636
  %1018 = vmatprep.subr.bf16.mxu0 0
  %1019 = vmatpush1.bf16.msra.mxu0 %v637
  %1020 = vmatprep.subr.bf16.mxu0 0
  %1021 = vmatpush1.bf16.msra.mxu0 %v638
  %1022 = vmatprep.subr.bf16.mxu0 0
  %1023 = vmatpush1.bf16.msra.mxu0 %v639
  %1024 = vmatprep.mubr.bf16.mxu0 %v929
  %1025 = vmatmul.mubr.bf16.gmra.mrb[0].mxu0 %v928
  %v1026 = vpop.f32.mrb[0].mxu0
  %v1027 = vadd.f32 %v675, %v1026
  %v1028 = vpop.f32.mrb[0].mxu0
  %v1029 = vpop.f32.mrb[0].mxu0
  %v1030 = vadd.f32 %v680, %v1029
  %v1031 = vpop.f32.mrb[0].mxu0
  %1032 = vmatprep.mubr.bf16.mxu0 %v931
  %1033 = vmatmul.mubr.bf16.gmra.mrb[0].mxu0 %v930
  %v1034 = vpop.f32.mrb[0].mxu0
  %v1035 = vadd.f32 %v685, %v1034
  %v1036 = vpop.f32.mrb[0].mxu0
  %v1037 = vpop.f32.mrb[0].mxu0
  %v1038 = vadd.f32 %v690, %v1037
  %v1039 = vpop.f32.mrb[0].mxu0
  %1040 = vmatprep.mubr.bf16.mxu0 %v933
  %1041 = vmatmul.mubr.bf16.gmra.mrb[0].mxu0 %v932
  %v1042 = vpop.f32.mrb[0].mxu0
  %v1043 = vadd.f32 %v695, %v1042
  %v1044 = vpop.f32.mrb[0].mxu0
  %v1045 = vpop.f32.mrb[0].mxu0
  %v1046 = vadd.f32 %v700, %v1045
  %v1047 = vpop.f32.mrb[0].mxu0
  %1048 = vmatprep.mubr.bf16.mxu0 %v935
  %1049 = vmatmul.mubr.bf16.gmra.mrb[0].mxu0 %v934
  %v1050 = vpop.f32.mrb[0].mxu0
  %v1051 = vadd.f32 %v705, %v1050
  %v1052 = vpop.f32.mrb[0].mxu0
  %v1053 = vpop.f32.mrb[0].mxu0
  %v1054 = vadd.f32 %v710, %v1053
  %v1055 = vpop.f32.mrb[0].mxu0
  %1056 = vmatprep.mubr.bf16.mxu0 %v937
  %1057 = vmatmul.mubr.bf16.gmra.mrb[0].mxu0 %v936
  %v1058 = vpop.f32.mrb[0].mxu0
  %v1059 = vadd.f32 %v715, %v1058
  %v1060 = vpop.f32.mrb[0].mxu0
  %v1061 = vpop.f32.mrb[0].mxu0
  %v1062 = vadd.f32 %v720, %v1061
  %v1063 = vpop.f32.mrb[0].mxu0
  %1064 = vmatprep.mubr.bf16.mxu0 %v939
  %1065 = vmatmul.mubr.bf16.gmra.mrb[0].mxu0 %v938
  %v1066 = vpop.f32.mrb[0].mxu0
  %v1067 = vadd.f32 %v725, %v1066
  %v1068 = vpop.f32.mrb[0].mxu0
  %v1069 = vpop.f32.mrb[0].mxu0
  %v1070 = vadd.f32 %v730, %v1069
  %v1071 = vpop.f32.mrb[0].mxu0
  %1072 = vmatprep.mubr.bf16.mxu0 %v941
  %1073 = vmatmul.mubr.bf16.gmra.mrb[0].mxu0 %v940
  %v1074 = vpop.f32.mrb[0].mxu0
  %v1075 = vadd.f32 %v735, %v1074
  %v1076 = vpop.f32.mrb[0].mxu0
  %v1077 = vpop.f32.mrb[0].mxu0
  %v1078 = vadd.f32 %v740, %v1077
  %v1079 = vpop.f32.mrb[0].mxu0
  %1080 = vmatprep.mubr.bf16.mxu0 %v943
  %1081 = vmatmul.mubr.bf16.gmra.mrb[0].mxu0 %v942
  %v1082 = vpop.f32.mrb[0].mxu0
  %v1083 = vadd.f32 %v745, %v1082
  %v1084 = vpop.f32.mrb[0].mxu0
  %v1085 = vpop.f32.mrb[0].mxu0
  %v1086 = vadd.f32 %v750, %v1085
  %v1087 = vpop.f32.mrb[0].mxu0
  %1088 = vmatprep.mubr.bf16.mxu0 %v945
  %1089 = vmatmul.mubr.bf16.gmra.mrb[0].mxu0 %v944
  %v1090 = vpop.f32.mrb[0].mxu0
  %v1091 = vadd.f32 %v755, %v1090
  %v1092 = vpop.f32.mrb[0].mxu0
  %v1093 = vpop.f32.mrb[0].mxu0
  %v1094 = vadd.f32 %v760, %v1093
  %v1095 = vpop.f32.mrb[0].mxu0
  %1096 = vmatprep.mubr.bf16.mxu0 %v947
  %1097 = vmatmul.mubr.bf16.gmra.mrb[0].mxu0 %v946
  %v1098 = vpop.f32.mrb[0].mxu0
  %v1099 = vadd.f32 %v765, %v1098
  %v1100 = vpop.f32.mrb[0].mxu0
  %v1101 = vpop.f32.mrb[0].mxu0
  %v1102 = vadd.f32 %v770, %v1101
  %v1103 = vpop.f32.mrb[0].mxu0
  %1104 = vmatprep.mubr.bf16.mxu0 %v949
  %1105 = vmatmul.mubr.bf16.gmra.mrb[0].mxu0 %v948
  %v1106 = vpop.f32.mrb[0].mxu0
  %v1107 = vadd.f32 %v775, %v1106
  %v1108 = vpop.f32.mrb[0].mxu0
  %v1109 = vpop.f32.mrb[0].mxu0
  %v1110 = vadd.f32 %v780, %v1109
  %v1111 = vpop.f32.mrb[0].mxu0
  %1112 = vmatprep.mubr.bf16.mxu0 %v951
  %1113 = vmatmul.mubr.bf16.gmra.mrb[0].mxu0 %v950
  %v1114 = vpop.f32.mrb[0].mxu0
  %v1115 = vadd.f32 %v785, %v1114
  %v1116 = vpop.f32.mrb[0].mxu0
  %v1117 = vpop.f32.mrb[0].mxu0
  %v1118 = vadd.f32 %v790, %v1117
  %v1119 = vpop.f32.mrb[0].mxu0
  %1120 = vmatprep.mubr.bf16.mxu0 %v953
  %1121 = vmatmul.mubr.bf16.gmra.mrb[0].mxu0 %v952
  %v1122 = vpop.f32.mrb[0].mxu0
  %v1123 = vadd.f32 %v795, %v1122
  %v1124 = vpop.f32.mrb[0].mxu0
  %v1125 = vpop.f32.mrb[0].mxu0
  %v1126 = vadd.f32 %v800, %v1125
  %v1127 = vpop.f32.mrb[0].mxu0
  %1128 = vmatprep.mubr.bf16.mxu0 %v955
  %1129 = vmatmul.mubr.bf16.gmra.mrb[0].mxu0 %v954
  %v1130 = vpop.f32.mrb[0].mxu0
  %v1131 = vadd.f32 %v805, %v1130
  %v1132 = vpop.f32.mrb[0].mxu0
  %v1133 = vpop.f32.mrb[0].mxu0
  %v1134 = vadd.f32 %v810, %v1133
  %v1135 = vpop.f32.mrb[0].mxu0
  %1136 = vmatprep.mubr.bf16.mxu0 %v957
  %1137 = vmatmul.mubr.bf16.gmra.mrb[0].mxu0 %v956
  %v1138 = vpop.f32.mrb[0].mxu0
  %v1139 = vadd.f32 %v815, %v1138
  %v1140 = vpop.f32.mrb[0].mxu0
  %v1141 = vpop.f32.mrb[0].mxu0
  %v1142 = vadd.f32 %v820, %v1141
  %v1143 = vpop.f32.mrb[0].mxu0
  %1144 = vmatprep.mubr.bf16.mxu0 %v959
  %1145 = vmatmul.mubr.bf16.gmra.mrb[0].mxu0 %v958
  %v1146 = vpop.f32.mrb[0].mxu0
  %v1147 = vadd.f32 %v825, %v1146
  %v1148 = vpop.f32.mrb[0].mxu0
  %v1149 = vpop.f32.mrb[0].mxu0
  %v1150 = vadd.f32 %v830, %v1149
  %v1151 = vpop.f32.mrb[0].mxu0
  %1152 = vdwg.mxu0
  %v1153 = vmax.f32 %v1027, 0.0
  %v1154 = vmax.f32 %v1030, 0.0
  %v1155 = vmax.f32 %v1035, 0.0
  %v1156 = vmax.f32 %v1038, 0.0
  %v1157 = vmax.f32 %v1043, 0.0
  %v1158 = vmax.f32 %v1046, 0.0
  %v1159 = vmax.f32 %v1051, 0.0
  %v1160 = vmax.f32 %v1054, 0.0
  %v1161 = vmax.f32 %v1059, 0.0
  %v1162 = vmax.f32 %v1062, 0.0
  %v1163 = vmax.f32 %v1067, 0.0
  %v1164 = vmax.f32 %v1070, 0.0
  %v1165 = vmax.f32 %v1075, 0.0
  %v1166 = vmax.f32 %v1078, 0.0
  %v1167 = vmax.f32 %v1083, 0.0
  %v1168 = vmax.f32 %v1086, 0.0
  %v1169 = vmax.f32 %v1091, 0.0
  %v1170 = vmax.f32 %v1094, 0.0
  %v1171 = vmax.f32 %v1099, 0.0
  %v1172 = vmax.f32 %v1102, 0.0
  %v1173 = vmax.f32 %v1107, 0.0
  %v1174 = vmax.f32 %v1110, 0.0
  %v1175 = vmax.f32 %v1115, 0.0
  %v1176 = vmax.f32 %v1118, 0.0
  %v1177 = vmax.f32 %v1123, 0.0
  %v1178 = vmax.f32 %v1126, 0.0
  %v1179 = vmax.f32 %v1131, 0.0
  %v1180 = vmax.f32 %v1134, 0.0
  %v1181 = vmax.f32 %v1139, 0.0
  %v1182 = vmax.f32 %v1142, 0.0
  %v1183 = vmax.f32 %v1147, 0.0
  %v1184 = vmax.f32 %v1150, 0.0
  %v1185 = vld [vmem:[%s5] sm:$0xff]
  %v1186 = vld [vmem:[%s5 + $0x8] sm:$0xff]
  %v1187 = vld [vmem:[%s5 + $0x10] sm:$0xff]
  %v1188 = vld [vmem:[%s5 + $0x18] sm:$0xff]
  %v1189 = vld [vmem:[%s5 + $0x20] sm:$0xff]
  %v1190 = vld [vmem:[%s5 + $0x28] sm:$0xff]
  %v1191 = vld [vmem:[%s5 + $0x30] sm:$0xff]
  %v1192 = vld [vmem:[%s5 + $0x38] sm:$0xff]
  %v1193 = vld [vmem:[%s5 + $0x40] sm:$0xff]
  %v1194 = vld [vmem:[%s5 + $0x48] sm:$0xff]
  %v1195 = vld [vmem:[%s5 + $0x50] sm:$0xff]
  %v1196 = vld [vmem:[%s5 + $0x58] sm:$0xff]
  %v1197 = vld [vmem:[%s5 + $0x60] sm:$0xff]
  %v1198 = vld [vmem:[%s5 + $0x68] sm:$0xff]
  %v1199 = vld [vmem:[%s5 + $0x70] sm:$0xff]
  %v1200 = vld [vmem:[%s5 + $0x78] sm:$0xff]
  %v1201 = vld [vmem:[%s5 + $0x80] sm:$0xff]
  %v1202 = vld [vmem:[%s5 + $0x88] sm:$0xff]
  %v1203 = vld [vmem:[%s5 + $0x90] sm:$0xff]
  %v1204 = vld [vmem:[%s5 + $0x98] sm:$0xff]
  %v1205 = vld [vmem:[%s5 + $0xa0] sm:$0xff]
  %v1206 = vld [vmem:[%s5 + $0xa8] sm:$0xff]
  %v1207 = vld [vmem:[%s5 + $0xb0] sm:$0xff]
  %v1208 = vld [vmem:[%s5 + $0xb8] sm:$0xff]
  %v1209 = vld [vmem:[%s5 + $0xc0] sm:$0xff]
  %v1210 = vld [vmem:[%s5 + $0xc8] sm:$0xff]
  %v1211 = vld [vmem:[%s5 + $0xd0] sm:$0xff]
  %v1212 = vld [vmem:[%s5 + $0xd8] sm:$0xff]
  %v1213 = vld [vmem:[%s5 + $0xe0] sm:$0xff]
  %v1214 = vld [vmem:[%s5 + $0xe8] sm:$0xff]
  %v1215 = vld [vmem:[%s5 + $0xf0] sm:$0xff]
  %v1216 = vld [vmem:[%s5 + $0xf8] sm:$0xff]
  %v1217 = vpack.c.bf16 %v1154, %v1153
  %v1218 = vpack.c.bf16 %v1156, %v1155
  %v1219 = vpack.c.bf16 %v1158, %v1157
  %v1220 = vpack.c.bf16 %v1160, %v1159
  %v1221 = vpack.c.bf16 %v1162, %v1161
  %v1222 = vpack.c.bf16 %v1164, %v1163
  %v1223 = vpack.c.bf16 %v1166, %v1165
  %v1224 = vpack.c.bf16 %v1168, %v1167
  %v1225 = vpack.c.bf16 %v1170, %v1169
  %v1226 = vpack.c.bf16 %v1172, %v1171
  %v1227 = vpack.c.bf16 %v1174, %v1173
  %v1228 = vpack.c.bf16 %v1176, %v1175
  %v1229 = vpack.c.bf16 %v1178, %v1177
  %v1230 = vpack.c.bf16 %v1180, %v1179
  %v1231 = vpack.c.bf16 %v1182, %v1181
  %v1232 = vpack.c.bf16 %v1184, %v1183
  %v1233 = vld [vmem:[%s6] sm:$0xff]
  %v1234 = vld [vmem:[%s6 + $0x8] sm:$0xff]
  %v1235 = vld [vmem:[%s6 + $0x10] sm:$0xff]
  %v1236 = vld [vmem:[%s6 + $0x18] sm:$0xff]
  %v1237 = vld [vmem:[%s6 + $0x20] sm:$0xff]
  %v1238 = vld [vmem:[%s6 + $0x28] sm:$0xff]
  %v1239 = vld [vmem:[%s6 + $0x30] sm:$0xff]
  %v1240 = vld [vmem:[%s6 + $0x38] sm:$0xff]
  %v1241 = vld [vmem:[%s6 + $0x40] sm:$0xff]
  %v1242 = vld [vmem:[%s6 + $0x48] sm:$0xff]
  %v1243 = vld [vmem:[%s6 + $0x50] sm:$0xff]
  %v1244 = vld [vmem:[%s6 + $0x58] sm:$0xff]
  %v1245 = vld [vmem:[%s6 + $0x60] sm:$0xff]
  %v1246 = vld [vmem:[%s6 + $0x68] sm:$0xff]
  %v1247 = vld [vmem:[%s6 + $0x70] sm:$0xff]
  %v1248 = vld [vmem:[%s6 + $0x78] sm:$0xff]
  %v1249 = vld [vmem:[%s6 + $0x80] sm:$0xff]
  %v1250 = vld [vmem:[%s6 + $0x88] sm:$0xff]
  %v1251 = vld [vmem:[%s6 + $0x90] sm:$0xff]
  %v1252 = vld [vmem:[%s6 + $0x98] sm:$0xff]
  %v1253 = vld [vmem:[%s6 + $0xa0] sm:$0xff]
  %v1254 = vld [vmem:[%s6 + $0xa8] sm:$0xff]
  %v1255 = vld [vmem:[%s6 + $0xb0] sm:$0xff]
  %v1256 = vld [vmem:[%s6 + $0xb8] sm:$0xff]
  %v1257 = vld [vmem:[%s6 + $0xc0] sm:$0xff]
  %v1258 = vld [vmem:[%s6 + $0xc8] sm:$0xff]
  %v1259 = vld [vmem:[%s6 + $0xd0] sm:$0xff]
  %v1260 = vld [vmem:[%s6 + $0xd8] sm:$0xff]
  %v1261 = vld [vmem:[%s6 + $0xe0] sm:$0xff]
  %v1262 = vld [vmem:[%s6 + $0xe8] sm:$0xff]
  %v1263 = vld [vmem:[%s6 + $0xf0] sm:$0xff]
  %v1264 = vld [vmem:[%s6 + $0xf8] sm:$0xff]
  %1266 = vset.pattern.permute.xlu0 0
  %1267 = vperm.xlu0 %1266, %v1233
  %v1268 = vpop.permute.xlu0 %1267
  %1271 = vset.pattern.permute.xlu0 0
  %1272 = vperm.xlu0 %1271, %v1234
  %v1273 = vpop.permute.xlu0 %1272
  %1276 = vset.pattern.permute.xlu0 0
  %1277 = vperm.xlu0 %1276, %v1235
  %v1278 = vpop.permute.xlu0 %1277
  %1281 = vset.pattern.permute.xlu0 0
  %1282 = vperm.xlu0 %1281, %v1236
  %v1283 = vpop.permute.xlu0 %1282
  %1286 = vset.pattern.permute.xlu0 0
  %1287 = vperm.xlu0 %1286, %v1237
  %v1288 = vpop.permute.xlu0 %1287
  %1291 = vset.pattern.permute.xlu0 0
  %1292 = vperm.xlu0 %1291, %v1238
  %v1293 = vpop.permute.xlu0 %1292
  %1296 = vset.pattern.permute.xlu0 0
  %1297 = vperm.xlu0 %1296, %v1239
  %v1298 = vpop.permute.xlu0 %1297
  %1301 = vset.pattern.permute.xlu0 0
  %1302 = vperm.xlu0 %1301, %v1240
  %v1303 = vpop.permute.xlu0 %1302
  %1306 = vset.pattern.permute.xlu0 0
  %1307 = vperm.xlu0 %1306, %v1241
  %v1308 = vpop.permute.xlu0 %1307
  %1311 = vset.pattern.permute.xlu0 0
  %1312 = vperm.xlu0 %1311, %v1242
  %v1313 = vpop.permute.xlu0 %1312
  %1316 = vset.pattern.permute.xlu0 0
  %1317 = vperm.xlu0 %1316, %v1243
  %v1318 = vpop.permute.xlu0 %1317
  %1321 = vset.pattern.permute.xlu0 0
  %1322 = vperm.xlu0 %1321, %v1244
  %v1323 = vpop.permute.xlu0 %1322
  %1326 = vset.pattern.permute.xlu0 0
  %1327 = vperm.xlu0 %1326, %v1245
  %v1328 = vpop.permute.xlu0 %1327
  %1331 = vset.pattern.permute.xlu0 0
  %1332 = vperm.xlu0 %1331, %v1246
  %v1333 = vpop.permute.xlu0 %1332
  %1336 = vset.pattern.permute.xlu0 0
  %1337 = vperm.xlu0 %1336, %v1247
  %v1338 = vpop.permute.xlu0 %1337
  %1341 = vset.pattern.permute.xlu0 0
  %1342 = vperm.xlu0 %1341, %v1248
  %v1343 = vpop.permute.xlu0 %1342
  %1346 = vset.pattern.permute.xlu0 0
  %1347 = vperm.xlu0 %1346, %v1249
  %v1348 = vpop.permute.xlu0 %1347
  %1351 = vset.pattern.permute.xlu0 0
  %1352 = vperm.xlu0 %1351, %v1250
  %v1353 = vpop.permute.xlu0 %1352
  %1356 = vset.pattern.permute.xlu0 0
  %1357 = vperm.xlu0 %1356, %v1251
  %v1358 = vpop.permute.xlu0 %1357
  %1361 = vset.pattern.permute.xlu0 0
  %1362 = vperm.xlu0 %1361, %v1252
  %v1363 = vpop.permute.xlu0 %1362
  %1366 = vset.pattern.permute.xlu0 0
  %1367 = vperm.xlu0 %1366, %v1253
  %v1368 = vpop.permute.xlu0 %1367
  %1371 = vset.pattern.permute.xlu0 0
  %1372 = vperm.xlu0 %1371, %v1254
  %v1373 = vpop.permute.xlu0 %1372
  %1376 = vset.pattern.permute.xlu0 0
  %1377 = vperm.xlu0 %1376, %v1255
  %v1378 = vpop.permute.xlu0 %1377
  %1381 = vset.pattern.permute.xlu0 0
  %1382 = vperm.xlu0 %1381, %v1256
  %v1383 = vpop.permute.xlu0 %1382
  %1386 = vset.pattern.permute.xlu0 0
  %1387 = vperm.xlu0 %1386, %v1257
  %v1388 = vpop.permute.xlu0 %1387
  %1391 = vset.pattern.permute.xlu0 0
  %1392 = vperm.xlu0 %1391, %v1258
  %v1393 = vpop.permute.xlu0 %1392
  %1396 = vset.pattern.permute.xlu0 0
  %1397 = vperm.xlu0 %1396, %v1259
  %v1398 = vpop.permute.xlu0 %1397
  %1401 = vset.pattern.permute.xlu0 0
  %1402 = vperm.xlu0 %1401, %v1260
  %v1403 = vpop.permute.xlu0 %1402
  %1406 = vset.pattern.permute.xlu0 0
  %1407 = vperm.xlu0 %1406, %v1261
  %v1408 = vpop.permute.xlu0 %1407
  %1411 = vset.pattern.permute.xlu0 0
  %1412 = vperm.xlu0 %1411, %v1262
  %v1413 = vpop.permute.xlu0 %1412
  %1416 = vset.pattern.permute.xlu0 0
  %1417 = vperm.xlu0 %1416, %v1263
  %v1418 = vpop.permute.xlu0 %1417
  %1421 = vset.pattern.permute.xlu0 0
  %1422 = vperm.xlu0 %1421, %v1264
  %v1423 = vpop.permute.xlu0 %1422
  %v1457 = vunpack.c.l.b16 %v1185
  %v1458 = vunpack.c.h.b16 %v1185
  %v1459 = vunpack.c.l.b16 %v1186
  %v1460 = vunpack.c.h.b16 %v1186
  %v1461 = vunpack.c.l.b16 %v1187
  %v1462 = vunpack.c.h.b16 %v1187
  %v1463 = vunpack.c.l.b16 %v1188
  %v1464 = vunpack.c.h.b16 %v1188
  %v1465 = vunpack.c.l.b16 %v1189
  %v1466 = vunpack.c.h.b16 %v1189
  %v1467 = vunpack.c.l.b16 %v1190
  %v1468 = vunpack.c.h.b16 %v1190
  %v1469 = vunpack.c.l.b16 %v1191
  %v1470 = vunpack.c.h.b16 %v1191
  %v1471 = vunpack.c.l.b16 %v1192
  %v1472 = vunpack.c.h.b16 %v1192
  %v1473 = vunpack.c.l.b16 %v1193
  %v1474 = vunpack.c.h.b16 %v1193
  %v1475 = vunpack.c.l.b16 %v1194
  %v1476 = vunpack.c.h.b16 %v1194
  %v1477 = vunpack.c.l.b16 %v1195
  %v1478 = vunpack.c.h.b16 %v1195
  %v1479 = vunpack.c.l.b16 %v1196
  %v1480 = vunpack.c.h.b16 %v1196
  %v1481 = vunpack.c.l.b16 %v1197
  %v1482 = vunpack.c.h.b16 %v1197
  %v1483 = vunpack.c.l.b16 %v1198
  %v1484 = vunpack.c.h.b16 %v1198
  %v1485 = vunpack.c.l.b16 %v1199
  %v1486 = vunpack.c.h.b16 %v1199
  %v1487 = vunpack.c.l.b16 %v1200
  %v1488 = vunpack.c.h.b16 %v1200
  %v1489 = vunpack.c.l.b16 %v1201
  %v1490 = vunpack.c.h.b16 %v1201
  %v1491 = vunpack.c.l.b16 %v1202
  %v1492 = vunpack.c.h.b16 %v1202
  %v1493 = vunpack.c.l.b16 %v1203
  %v1494 = vunpack.c.h.b16 %v1203
  %v1495 = vunpack.c.l.b16 %v1204
  %v1496 = vunpack.c.h.b16 %v1204
  %v1497 = vunpack.c.l.b16 %v1205
  %v1498 = vunpack.c.h.b16 %v1205
  %v1499 = vunpack.c.l.b16 %v1206
  %v1500 = vunpack.c.h.b16 %v1206
  %v1501 = vunpack.c.l.b16 %v1207
  %v1502 = vunpack.c.h.b16 %v1207
  %v1503 = vunpack.c.l.b16 %v1208
  %v1504 = vunpack.c.h.b16 %v1208
  %v1505 = vunpack.c.l.b16 %v1209
  %v1506 = vunpack.c.h.b16 %v1209
  %v1507 = vunpack.c.l.b16 %v1210
  %v1508 = vunpack.c.h.b16 %v1210
  %v1509 = vunpack.c.l.b16 %v1211
  %v1510 = vunpack.c.h.b16 %v1211
  %v1511 = vunpack.c.l.b16 %v1212
  %v1512 = vunpack.c.h.b16 %v1212
  %v1513 = vunpack.c.l.b16 %v1213
  %v1514 = vunpack.c.h.b16 %v1213
  %v1515 = vunpack.c.l.b16 %v1214
  %v1516 = vunpack.c.h.b16 %v1214
  %v1517 = vunpack.c.l.b16 %v1215
  %v1518 = vunpack.c.h.b16 %v1215
  %v1519 = vunpack.c.l.b16 %v1216
  %v1520 = vunpack.c.h.b16 %v1216
  %v1521 = vpack.c.b16 %v1459, %v1457
  %v1522 = vpack.c.b16 %v1460, %v1458
  %v1523 = vpack.c.b16 %v1463, %v1461
  %v1524 = vpack.c.b16 %v1464, %v1462
  %v1525 = vpack.c.b16 %v1467, %v1465
  %v1526 = vpack.c.b16 %v1468, %v1466
  %v1527 = vpack.c.b16 %v1471, %v1469
  %v1528 = vpack.c.b16 %v1472, %v1470
  %v1529 = vpack.c.b16 %v1475, %v1473
  %v1530 = vpack.c.b16 %v1476, %v1474
  %v1531 = vpack.c.b16 %v1479, %v1477
  %v1532 = vpack.c.b16 %v1480, %v1478
  %v1533 = vpack.c.b16 %v1483, %v1481
  %v1534 = vpack.c.b16 %v1484, %v1482
  %v1535 = vpack.c.b16 %v1487, %v1485
  %v1536 = vpack.c.b16 %v1488, %v1486
  %v1537 = vpack.c.b16 %v1491, %v1489
  %v1538 = vpack.c.b16 %v1492, %v1490
  %v1539 = vpack.c.b16 %v1495, %v1493
  %v1540 = vpack.c.b16 %v1496, %v1494
  %v1541 = vpack.c.b16 %v1499, %v1497
  %v1542 = vpack.c.b16 %v1500, %v1498
  %v1543 = vpack.c.b16 %v1503, %v1501
  %v1544 = vpack.c.b16 %v1504, %v1502
  %v1545 = vpack.c.b16 %v1507, %v1505
  %v1546 = vpack.c.b16 %v1508, %v1506
  %v1547 = vpack.c.b16 %v1511, %v1509
  %v1548 = vpack.c.b16 %v1512, %v1510
  %v1549 = vpack.c.b16 %v1515, %v1513
  %v1550 = vpack.c.b16 %v1516, %v1514
  %v1551 = vpack.c.b16 %v1519, %v1517
  %v1552 = vpack.c.b16 %v1520, %v1518
  %1585 = vmatprep.subr.bf16.mxu0 0
  %1586 = vmatpush1.bf16.msra.mxu0 %v1217
  %1587 = vmatprep.subr.bf16.mxu0 0
  %1588 = vmatpush1.bf16.msra.mxu0 %v1218
  %1589 = vmatprep.subr.bf16.mxu0 0
  %1590 = vmatpush1.bf16.msra.mxu0 %v1219
  %1591 = vmatprep.subr.bf16.mxu0 0
  %1592 = vmatpush1.bf16.msra.mxu0 %v1220
  %1593 = vmatprep.subr.bf16.mxu0 0
  %1594 = vmatpush1.bf16.msra.mxu0 %v1221
  %1595 = vmatprep.subr.bf16.mxu0 0
  %1596 = vmatpush1.bf16.msra.mxu0 %v1222
  %1597 = vmatprep.subr.bf16.mxu0 0
  %1598 = vmatpush1.bf16.msra.mxu0 %v1223
  %1599 = vmatprep.subr.bf16.mxu0 0
  %1600 = vmatpush1.bf16.msra.mxu0 %v1224
  %1601 = vmatprep.subr.bf16.mxu0 0
  %1602 = vmatpush1.bf16.msra.mxu0 %v1225
  %1603 = vmatprep.subr.bf16.mxu0 0
  %1604 = vmatpush1.bf16.msra.mxu0 %v1226
  %1605 = vmatprep.subr.bf16.mxu0 0
  %1606 = vmatpush1.bf16.msra.mxu0 %v1227
  %1607 = vmatprep.subr.bf16.mxu0 0
  %1608 = vmatpush1.bf16.msra.mxu0 %v1228
  %1609 = vmatprep.subr.bf16.mxu0 0
  %1610 = vmatpush1.bf16.msra.mxu0 %v1229
  %1611 = vmatprep.subr.bf16.mxu0 0
  %1612 = vmatpush1.bf16.msra.mxu0 %v1230
  %1613 = vmatprep.subr.bf16.mxu0 0
  %1614 = vmatpush1.bf16.msra.mxu0 %v1231
  %1615 = vmatprep.subr.bf16.mxu0 0
  %1616 = vmatpush1.bf16.msra.mxu0 %v1232
  %1617 = vmatprep.mubr.bf16.mxu0 %v1522
  %1618 = vmatmul.mubr.bf16.gmra.mrb[0].mxu0 %v1521
  %v1619 = vpop.f32.mrb[0].mxu0
  %v1620 = vadd.f32 %v1268, %v1619
  %v1621 = vpop.f32.mrb[0].mxu0
  %v1622 = vpop.f32.mrb[0].mxu0
  %v1623 = vadd.f32 %v1273, %v1622
  %v1624 = vpop.f32.mrb[0].mxu0
  %1625 = vmatprep.mubr.bf16.mxu0 %v1524
  %1626 = vmatmul.mubr.bf16.gmra.mrb[0].mxu0 %v1523
  %v1627 = vpop.f32.mrb[0].mxu0
  %v1628 = vadd.f32 %v1278, %v1627
  %v1629 = vpop.f32.mrb[0].mxu0
  %v1630 = vpop.f32.mrb[0].mxu0
  %v1631 = vadd.f32 %v1283, %v1630
  %v1632 = vpop.f32.mrb[0].mxu0
  %1633 = vmatprep.mubr.bf16.mxu0 %v1526
  %1634 = vmatmul.mubr.bf16.gmra.mrb[0].mxu0 %v1525
  %v1635 = vpop.f32.mrb[0].mxu0
  %v1636 = vadd.f32 %v1288, %v1635
  %v1637 = vpop.f32.mrb[0].mxu0
  %v1638 = vpop.f32.mrb[0].mxu0
  %v1639 = vadd.f32 %v1293, %v1638
  %v1640 = vpop.f32.mrb[0].mxu0
  %1641 = vmatprep.mubr.bf16.mxu0 %v1528
  %1642 = vmatmul.mubr.bf16.gmra.mrb[0].mxu0 %v1527
  %v1643 = vpop.f32.mrb[0].mxu0
  %v1644 = vadd.f32 %v1298, %v1643
  %v1645 = vpop.f32.mrb[0].mxu0
  %v1646 = vpop.f32.mrb[0].mxu0
  %v1647 = vadd.f32 %v1303, %v1646
  %v1648 = vpop.f32.mrb[0].mxu0
  %1649 = vmatprep.mubr.bf16.mxu0 %v1530
  %1650 = vmatmul.mubr.bf16.gmra.mrb[0].mxu0 %v1529
  %v1651 = vpop.f32.mrb[0].mxu0
  %v1652 = vadd.f32 %v1308, %v1651
  %v1653 = vpop.f32.mrb[0].mxu0
  %v1654 = vpop.f32.mrb[0].mxu0
  %v1655 = vadd.f32 %v1313, %v1654
  %v1656 = vpop.f32.mrb[0].mxu0
  %1657 = vmatprep.mubr.bf16.mxu0 %v1532
  %1658 = vmatmul.mubr.bf16.gmra.mrb[0].mxu0 %v1531
  %v1659 = vpop.f32.mrb[0].mxu0
  %v1660 = vadd.f32 %v1318, %v1659
  %v1661 = vpop.f32.mrb[0].mxu0
  %v1662 = vpop.f32.mrb[0].mxu0
  %v1663 = vadd.f32 %v1323, %v1662
  %v1664 = vpop.f32.mrb[0].mxu0
  %1665 = vmatprep.mubr.bf16.mxu0 %v1534
  %1666 = vmatmul.mubr.bf16.gmra.mrb[0].mxu0 %v1533
  %v1667 = vpop.f32.mrb[0].mxu0
  %v1668 = vadd.f32 %v1328, %v1667
  %v1669 = vpop.f32.mrb[0].mxu0
  %v1670 = vpop.f32.mrb[0].mxu0
  %v1671 = vadd.f32 %v1333, %v1670
  %v1672 = vpop.f32.mrb[0].mxu0
  %1673 = vmatprep.mubr.bf16.mxu0 %v1536
  %1674 = vmatmul.mubr.bf16.gmra.mrb[0].mxu0 %v1535
  %v1675 = vpop.f32.mrb[0].mxu0
  %v1676 = vadd.f32 %v1338, %v1675
  %v1677 = vpop.f32.mrb[0].mxu0
  %v1678 = vpop.f32.mrb[0].mxu0
  %v1679 = vadd.f32 %v1343, %v1678
  %v1680 = vpop.f32.mrb[0].mxu0
  %1681 = vmatprep.mubr.bf16.mxu0 %v1538
  %1682 = vmatmul.mubr.bf16.gmra.mrb[0].mxu0 %v1537
  %v1683 = vpop.f32.mrb[0].mxu0
  %v1684 = vadd.f32 %v1348, %v1683
  %v1685 = vpop.f32.mrb[0].mxu0
  %v1686 = vpop.f32.mrb[0].mxu0
  %v1687 = vadd.f32 %v1353, %v1686
  %v1688 = vpop.f32.mrb[0].mxu0
  %1689 = vmatprep.mubr.bf16.mxu0 %v1540
  %1690 = vmatmul.mubr.bf16.gmra.mrb[0].mxu0 %v1539
  %v1691 = vpop.f32.mrb[0].mxu0
  %v1692 = vadd.f32 %v1358, %v1691
  %v1693 = vpop.f32.mrb[0].mxu0
  %v1694 = vpop.f32.mrb[0].mxu0
  %v1695 = vadd.f32 %v1363, %v1694
  %v1696 = vpop.f32.mrb[0].mxu0
  %1697 = vmatprep.mubr.bf16.mxu0 %v1542
  %1698 = vmatmul.mubr.bf16.gmra.mrb[0].mxu0 %v1541
  %v1699 = vpop.f32.mrb[0].mxu0
  %v1700 = vadd.f32 %v1368, %v1699
  %v1701 = vpop.f32.mrb[0].mxu0
  %v1702 = vpop.f32.mrb[0].mxu0
  %v1703 = vadd.f32 %v1373, %v1702
  %v1704 = vpop.f32.mrb[0].mxu0
  %1705 = vmatprep.mubr.bf16.mxu0 %v1544
  %1706 = vmatmul.mubr.bf16.gmra.mrb[0].mxu0 %v1543
  %v1707 = vpop.f32.mrb[0].mxu0
  %v1708 = vadd.f32 %v1378, %v1707
  %v1709 = vpop.f32.mrb[0].mxu0
  %v1710 = vpop.f32.mrb[0].mxu0
  %v1711 = vadd.f32 %v1383, %v1710
  %v1712 = vpop.f32.mrb[0].mxu0
  %1713 = vmatprep.mubr.bf16.mxu0 %v1546
  %1714 = vmatmul.mubr.bf16.gmra.mrb[0].mxu0 %v1545
  %v1715 = vpop.f32.mrb[0].mxu0
  %v1716 = vadd.f32 %v1388, %v1715
  %v1717 = vpop.f32.mrb[0].mxu0
  %v1718 = vpop.f32.mrb[0].mxu0
  %v1719 = vadd.f32 %v1393, %v1718
  %v1720 = vpop.f32.mrb[0].mxu0
  %1721 = vmatprep.mubr.bf16.mxu0 %v1548
  %1722 = vmatmul.mubr.bf16.gmra.mrb[0].mxu0 %v1547
  %v1723 = vpop.f32.mrb[0].mxu0
  %v1724 = vadd.f32 %v1398, %v1723
  %v1725 = vpop.f32.mrb[0].mxu0
  %v1726 = vpop.f32.mrb[0].mxu0
  %v1727 = vadd.f32 %v1403, %v1726
  %v1728 = vpop.f32.mrb[0].mxu0
  %1729 = vmatprep.mubr.bf16.mxu0 %v1550
  %1730 = vmatmul.mubr.bf16.gmra.mrb[0].mxu0 %v1549
  %v1731 = vpop.f32.mrb[0].mxu0
  %v1732 = vadd.f32 %v1408, %v1731
  %v1733 = vpop.f32.mrb[0].mxu0
  %v1734 = vpop.f32.mrb[0].mxu0
  %v1735 = vadd.f32 %v1413, %v1734
  %v1736 = vpop.f32.mrb[0].mxu0
  %1737 = vmatprep.mubr.bf16.mxu0 %v1552
  %1738 = vmatmul.mubr.bf16.gmra.mrb[0].mxu0 %v1551
  %v1739 = vpop.f32.mrb[0].mxu0
  %v1740 = vadd.f32 %v1418, %v1739
  %v1741 = vpop.f32.mrb[0].mxu0
  %v1742 = vpop.f32.mrb[0].mxu0
  %v1743 = vadd.f32 %v1423, %v1742
  %v1744 = vpop.f32.mrb[0].mxu0
  %1745 = vdwg.mxu0
  %v1746 = vmax.f32 %v1620, 0.0
  %v1747 = vmax.f32 %v1623, 0.0
  %v1748 = vmax.f32 %v1628, 0.0
  %v1749 = vmax.f32 %v1631, 0.0
  %v1750 = vmax.f32 %v1636, 0.0
  %v1751 = vmax.f32 %v1639, 0.0
  %v1752 = vmax.f32 %v1644, 0.0
  %v1753 = vmax.f32 %v1647, 0.0
  %v1754 = vmax.f32 %v1652, 0.0
  %v1755 = vmax.f32 %v1655, 0.0
  %v1756 = vmax.f32 %v1660, 0.0
  %v1757 = vmax.f32 %v1663, 0.0
  %v1758 = vmax.f32 %v1668, 0.0
  %v1759 = vmax.f32 %v1671, 0.0
  %v1760 = vmax.f32 %v1676, 0.0
  %v1761 = vmax.f32 %v1679, 0.0
  %v1762 = vmax.f32 %v1684, 0.0
  %v1763 = vmax.f32 %v1687, 0.0
  %v1764 = vmax.f32 %v1692, 0.0
  %v1765 = vmax.f32 %v1695, 0.0
  %v1766 = vmax.f32 %v1700, 0.0
  %v1767 = vmax.f32 %v1703, 0.0
  %v1768 = vmax.f32 %v1708, 0.0
  %v1769 = vmax.f32 %v1711, 0.0
  %v1770 = vmax.f32 %v1716, 0.0
  %v1771 = vmax.f32 %v1719, 0.0
  %v1772 = vmax.f32 %v1724, 0.0
  %v1773 = vmax.f32 %v1727, 0.0
  %v1774 = vmax.f32 %v1732, 0.0
  %v1775 = vmax.f32 %v1735, 0.0
  %v1776 = vmax.f32 %v1740, 0.0
  %v1777 = vmax.f32 %v1743, 0.0
  %v1778 = vld [vmem:[%s7] sm:$0xff]
  %v1779 = vld [vmem:[%s7 + $0x8] sm:$0xff]
  %v1780 = vld [vmem:[%s7 + $0x10] sm:$0xff]
  %v1781 = vld [vmem:[%s7 + $0x18] sm:$0xff]
  %v1782 = vld [vmem:[%s7 + $0x20] sm:$0xff]
  %v1783 = vld [vmem:[%s7 + $0x28] sm:$0xff]
  %v1784 = vld [vmem:[%s7 + $0x30] sm:$0xff]
  %v1785 = vld [vmem:[%s7 + $0x38] sm:$0xff]
  %v1786 = vld [vmem:[%s7 + $0x40] sm:$0xff]
  %v1787 = vld [vmem:[%s7 + $0x48] sm:$0xff]
  %v1788 = vld [vmem:[%s7 + $0x50] sm:$0xff]
  %v1789 = vld [vmem:[%s7 + $0x58] sm:$0xff]
  %v1790 = vld [vmem:[%s7 + $0x60] sm:$0xff]
  %v1791 = vld [vmem:[%s7 + $0x68] sm:$0xff]
  %v1792 = vld [vmem:[%s7 + $0x70] sm:$0xff]
  %v1793 = vld [vmem:[%s7 + $0x78] sm:$0xff]
  %v1794 = vld [vmem:[%s7 + $0x80] sm:$0xff]
  %v1795 = vld [vmem:[%s7 + $0x88] sm:$0xff]
  %v1796 = vld [vmem:[%s7 + $0x90] sm:$0xff]
  %v1797 = vld [vmem:[%s7 + $0x98] sm:$0xff]
  %v1798 = vld [vmem:[%s7 + $0xa0] sm:$0xff]
  %v1799 = vld [vmem:[%s7 + $0xa8] sm:$0xff]
  %v1800 = vld [vmem:[%s7 + $0xb0] sm:$0xff]
  %v1801 = vld [vmem:[%s7 + $0xb8] sm:$0xff]
  %v1802 = vld [vmem:[%s7 + $0xc0] sm:$0xff]
  %v1803 = vld [vmem:[%s7 + $0xc8] sm:$0xff]
  %v1804 = vld [vmem:[%s7 + $0xd0] sm:$0xff]
  %v1805 = vld [vmem:[%s7 + $0xd8] sm:$0xff]
  %v1806 = vld [vmem:[%s7 + $0xe0] sm:$0xff]
  %v1807 = vld [vmem:[%s7 + $0xe8] sm:$0xff]
  %v1808 = vld [vmem:[%s7 + $0xf0] sm:$0xff]
  %v1809 = vld [vmem:[%s7 + $0xf8] sm:$0xff]
  %1811 = vset.pattern.permute.xlu0 0
  %1812 = vperm.xlu0 %1811, %v1778
  %v1813 = vpop.permute.xlu0 %1812
  %1816 = vset.pattern.permute.xlu0 0
  %1817 = vperm.xlu0 %1816, %v1779
  %v1818 = vpop.permute.xlu0 %1817
  %1821 = vset.pattern.permute.xlu0 0
  %1822 = vperm.xlu0 %1821, %v1780
  %v1823 = vpop.permute.xlu0 %1822
  %1826 = vset.pattern.permute.xlu0 0
  %1827 = vperm.xlu0 %1826, %v1781
  %v1828 = vpop.permute.xlu0 %1827
  %1831 = vset.pattern.permute.xlu0 0
  %1832 = vperm.xlu0 %1831, %v1782
  %v1833 = vpop.permute.xlu0 %1832
  %1836 = vset.pattern.permute.xlu0 0
  %1837 = vperm.xlu0 %1836, %v1783
  %v1838 = vpop.permute.xlu0 %1837
  %1841 = vset.pattern.permute.xlu0 0
  %1842 = vperm.xlu0 %1841, %v1784
  %v1843 = vpop.permute.xlu0 %1842
  %1846 = vset.pattern.permute.xlu0 0
  %1847 = vperm.xlu0 %1846, %v1785
  %v1848 = vpop.permute.xlu0 %1847
  %1851 = vset.pattern.permute.xlu0 0
  %1852 = vperm.xlu0 %1851, %v1786
  %v1853 = vpop.permute.xlu0 %1852
  %1856 = vset.pattern.permute.xlu0 0
  %1857 = vperm.xlu0 %1856, %v1787
  %v1858 = vpop.permute.xlu0 %1857
  %1861 = vset.pattern.permute.xlu0 0
  %1862 = vperm.xlu0 %1861, %v1788
  %v1863 = vpop.permute.xlu0 %1862
  %1866 = vset.pattern.permute.xlu0 0
  %1867 = vperm.xlu0 %1866, %v1789
  %v1868 = vpop.permute.xlu0 %1867
  %1871 = vset.pattern.permute.xlu0 0
  %1872 = vperm.xlu0 %1871, %v1790
  %v1873 = vpop.permute.xlu0 %1872
  %1876 = vset.pattern.permute.xlu0 0
  %1877 = vperm.xlu0 %1876, %v1791
  %v1878 = vpop.permute.xlu0 %1877
  %1881 = vset.pattern.permute.xlu0 0
  %1882 = vperm.xlu0 %1881, %v1792
  %v1883 = vpop.permute.xlu0 %1882
  %1886 = vset.pattern.permute.xlu0 0
  %1887 = vperm.xlu0 %1886, %v1793
  %v1888 = vpop.permute.xlu0 %1887
  %1891 = vset.pattern.permute.xlu0 0
  %1892 = vperm.xlu0 %1891, %v1794
  %v1893 = vpop.permute.xlu0 %1892
  %1896 = vset.pattern.permute.xlu0 0
  %1897 = vperm.xlu0 %1896, %v1795
  %v1898 = vpop.permute.xlu0 %1897
  %1901 = vset.pattern.permute.xlu0 0
  %1902 = vperm.xlu0 %1901, %v1796
  %v1903 = vpop.permute.xlu0 %1902
  %1906 = vset.pattern.permute.xlu0 0
  %1907 = vperm.xlu0 %1906, %v1797
  %v1908 = vpop.permute.xlu0 %1907
  %1911 = vset.pattern.permute.xlu0 0
  %1912 = vperm.xlu0 %1911, %v1798
  %v1913 = vpop.permute.xlu0 %1912
  %1916 = vset.pattern.permute.xlu0 0
  %1917 = vperm.xlu0 %1916, %v1799
  %v1918 = vpop.permute.xlu0 %1917
  %1921 = vset.pattern.permute.xlu0 0
  %1922 = vperm.xlu0 %1921, %v1800
  %v1923 = vpop.permute.xlu0 %1922
  %1926 = vset.pattern.permute.xlu0 0
  %1927 = vperm.xlu0 %1926, %v1801
  %v1928 = vpop.permute.xlu0 %1927
  %1931 = vset.pattern.permute.xlu0 0
  %1932 = vperm.xlu0 %1931, %v1802
  %v1933 = vpop.permute.xlu0 %1932
  %1936 = vset.pattern.permute.xlu0 0
  %1937 = vperm.xlu0 %1936, %v1803
  %v1938 = vpop.permute.xlu0 %1937
  %1941 = vset.pattern.permute.xlu0 0
  %1942 = vperm.xlu0 %1941, %v1804
  %v1943 = vpop.permute.xlu0 %1942
  %1946 = vset.pattern.permute.xlu0 0
  %1947 = vperm.xlu0 %1946, %v1805
  %v1948 = vpop.permute.xlu0 %1947
  %1951 = vset.pattern.permute.xlu0 0
  %1952 = vperm.xlu0 %1951, %v1806
  %v1953 = vpop.permute.xlu0 %1952
  %1956 = vset.pattern.permute.xlu0 0
  %1957 = vperm.xlu0 %1956, %v1807
  %v1958 = vpop.permute.xlu0 %1957
  %1961 = vset.pattern.permute.xlu0 0
  %1962 = vperm.xlu0 %1961, %v1808
  %v1963 = vpop.permute.xlu0 %1962
  %1966 = vset.pattern.permute.xlu0 0
  %1967 = vperm.xlu0 %1966, %v1809
  %v1968 = vpop.permute.xlu0 %1967
  %v1970 = vmul.f32 %v1746, %v1813
  %v1971 = vmul.f32 %v1747, %v1818
  %v1972 = vmul.f32 %v1748, %v1823
  %v1973 = vmul.f32 %v1749, %v1828
  %v1974 = vmul.f32 %v1750, %v1833
  %v1975 = vmul.f32 %v1751, %v1838
  %v1976 = vmul.f32 %v1752, %v1843
  %v1977 = vmul.f32 %v1753, %v1848
  %v1978 = vmul.f32 %v1754, %v1853
  %v1979 = vmul.f32 %v1755, %v1858
  %v1980 = vmul.f32 %v1756, %v1863
  %v1981 = vmul.f32 %v1757, %v1868
  %v1982 = vmul.f32 %v1758, %v1873
  %v1983 = vmul.f32 %v1759, %v1878
  %v1984 = vmul.f32 %v1760, %v1883
  %v1985 = vmul.f32 %v1761, %v1888
  %v1986 = vmul.f32 %v1762, %v1893
  %v1987 = vmul.f32 %v1763, %v1898
  %v1988 = vmul.f32 %v1764, %v1903
  %v1989 = vmul.f32 %v1765, %v1908
  %v1990 = vmul.f32 %v1766, %v1913
  %v1991 = vmul.f32 %v1767, %v1918
  %v1992 = vmul.f32 %v1768, %v1923
  %v1993 = vmul.f32 %v1769, %v1928
  %v1994 = vmul.f32 %v1770, %v1933
  %v1995 = vmul.f32 %v1771, %v1938
  %v1996 = vmul.f32 %v1772, %v1943
  %v1997 = vmul.f32 %v1773, %v1948
  %v1998 = vmul.f32 %v1774, %v1953
  %v1999 = vmul.f32 %v1775, %v1958
  %v2000 = vmul.f32 %v1776, %v1963
  %v2001 = vmul.f32 %v1777, %v1968
  %v2002 = vadd.f32 %v1970, %v1971
  %v2003 = vadd.f32 %v2002, %v1972
  %v2004 = vadd.f32 %v2003, %v1973
  %v2005 = vadd.f32 %v2004, %v1974
  %v2006 = vadd.f32 %v2005, %v1975
  %v2007 = vadd.f32 %v2006, %v1976
  %v2008 = vadd.f32 %v2007, %v1977
  %v2009 = vadd.f32 %v2008, %v1978
  %v2010 = vadd.f32 %v2009, %v1979
  %v2011 = vadd.f32 %v2010, %v1980
  %v2012 = vadd.f32 %v2011, %v1981
  %v2013 = vadd.f32 %v2012, %v1982
  %v2014 = vadd.f32 %v2013, %v1983
  %v2015 = vadd.f32 %v2014, %v1984
  %v2016 = vadd.f32 %v2015, %v1985
  %v2017 = vadd.f32 %v2016, %v1986
  %v2018 = vadd.f32 %v2017, %v1987
  %v2019 = vadd.f32 %v2018, %v1988
  %v2020 = vadd.f32 %v2019, %v1989
  %v2021 = vadd.f32 %v2020, %v1990
  %v2022 = vadd.f32 %v2021, %v1991
  %v2023 = vadd.f32 %v2022, %v1992
  %v2024 = vadd.f32 %v2023, %v1993
  %v2025 = vadd.f32 %v2024, %v1994
  %v2026 = vadd.f32 %v2025, %v1995
  %v2027 = vadd.f32 %v2026, %v1996
  %v2028 = vadd.f32 %v2027, %v1997
  %v2029 = vadd.f32 %v2028, %v1998
  %v2030 = vadd.f32 %v2029, %v1999
  %v2031 = vadd.f32 %v2030, %v2000
  %v2032 = vadd.f32 %v2031, %v2001
  %v2033 = vrot.slane %v2032, 4
  %v2034 = vadd.f32 %v2032, %v2033
  %v2035 = vrot.slane %v2034, 2
  %v2036 = vadd.f32 %v2034, %v2035
  %v2037 = vrot.slane %v2036, 1
  %v2038 = vadd.f32 %v2036, %v2037
  %v2039 = vld [vmem:[#allocation2] sm:$0x1]
  %2041 = vset.pattern.permute.xlu0 0
  %2042 = vperm.xlu0 %2041, %v2039
  %v2043 = vpop.permute.xlu0 %2042
  %v2045 = vlaneseq
  %v2046 = vshrl.u32 %v2045, 7
  %v2047 = vsub.s32 0, %v2046
  %v2048 = vrot.slane %v2043, %v2047
  %v2049 = vadd.f32 %v2038, %v2048
  %2050 = vst [vmem:[%s9] sm:$0x1] %v2049
  // Predicated region
  $region38: #{critic_forward.1} parent=0 // pred_check
    _
  $region39: #{critic_forward.1} parent=0 // pred_check_branch
    %2052 = sbr.rel (0) target = $region41
  $region40: #{critic_forward.1} parent=0 // pred_region
    _
  $region41: #{critic_forward.1} parent=0 // pred_fallthru
    _
  // Predicated region
  $region42: #{critic_forward.1} parent=0 // pred_check
    _
  $region43: #{critic_forward.1} parent=0 // pred_check_branch
    %2054 = sbr.rel (0) target = $region45
  $region44: #{critic_forward.1} parent=0 // pred_region
    _
  $region45: #{critic_forward.1} parent=0 // pred_fallthru
    _

</llo_original>
